<compile_context>
chip_gen: v7x
topology: tpu7x:2x2x1
jax: 0.10.0
libtpu: 0.0.40
codegen_flags: <defaults>
</compile_context>

<pallas_src>
import jax
import jax.numpy as jnp
import numpy as np
from jax.experimental import pallas as pl
from jax.experimental.pallas import tpu as pltpu

_EPS = 1e-5


def _padded_channels(c, width):
    """Smallest cp >= c such that width * cp is a multiple of 128 (lane dense)."""
    cp = c
    while (width * cp) % 128 != 0:
        cp += 1
    return cp


def _band_weights(w_hwio, width, cin_p, cout_p):
    """Fold the kw taps of a 3x3 conv into banded (W*cin_p, W*cout_p) matrices.

    w_hwio: (3, 3, Cin, Cout).  Returns band of shape (3, W*cin_p, W*cout_p)
    with band[kh][wi*cin_p + ci, wo*cout_p + co] = w_hwio[kh, wi-wo+1, ci, co],
    which also implicitly realizes the padding=1 behaviour along W.
    """
    _, _, cin, cout = w_hwio.shape
    band = jnp.zeros((3, width * cin_p, width * cout_p), jnp.float32)
    for kw in range(3):
        for wo in range(width):
            wi = wo + kw - 1
            if 0 <= wi < width:
                band = band.at[:, wi * cin_p:wi * cin_p + cin,
                               wo * cout_p:wo * cout_p + cout].set(w_hwio[:, kw])
    return band


def _make_double_conv_kernel(n, h, width, wci, wco):
    m = n * h
    inv_cnt = 1.0 / float(n * h * width)

    def conv_bn_relu(x_nhl, band_ref, t_ref, g_ref, beta_ref):
        """3x3 conv (H halo built in-kernel) + train-mode BN + ReLU.

        x_nhl : (n, h, lanes_in) f32, lane = w*Cp + c.
        Returns (m, wco) f32, lane = w*Cout_p + co.
        """
        lanes_in = x_nhl.shape[-1]
        zrow = jnp.zeros((n, 1, lanes_in), jnp.float32)
        xp = jnp.concatenate([zrow, x_nhl, zrow], axis=1)        # (n, h+2, lanes_in)

        acc = jnp.zeros((m, wco), jnp.float32)
        for kh in range(3):                                      # 3 wide-K bf16 MXU matmuls
            lhs = xp[:, kh:kh + h, :].reshape(m, lanes_in).astype(jnp.bfloat16)
            acc = acc + jnp.dot(lhs, band_ref[kh],
                                preferred_element_type=jnp.float32)
        # Conv bias intentionally omitted: training-mode BN subtracts the batch
        # mean, which cancels a per-channel constant exactly.

        # BatchNorm batch statistics: row-sum over the (m, wco) slab gives
        # per-(w, c) sums; the matmul with T (= kron(ones(W,W), eye(Cp))) sums
        # over w per channel and broadcasts the result back to all 128 lanes.
        s = jnp.sum(acc, axis=0, keepdims=True)                  # (1, wco)
        mean = jnp.dot(s, t_ref[...],
                       preferred_element_type=jnp.float32) * inv_cnt
        d = acc - mean
        sv = jnp.sum(d * d, axis=0, keepdims=True)
        var = jnp.dot(sv, t_ref[...],
                      preferred_element_type=jnp.float32) * inv_cnt
        y = d * jax.lax.rsqrt(var + _EPS) * g_ref[...] + beta_ref[...]
        return jnp.maximum(y, 0.0)

    def kernel(x_ref, w1_ref, w2_ref, t_ref,
               g1_ref, be1_ref, g2_ref, be2_ref, o_ref):
        x = x_ref[...].astype(jnp.float32)                       # (n, h, wci)
        y1 = conv_bn_relu(x, w1_ref, t_ref, g1_ref, be1_ref)     # (m, wco) stays in VMEM/vregs
        y2 = conv_bn_relu(y1.reshape(n, h, wco), w2_ref, t_ref, g2_ref, be2_ref)
        o_ref[...] = y2.reshape(n, h, wco)                       # lane-dense f32 stores

    return kernel


@jax.jit
def double_conv(x_nchw, params):
    n, cin, h, width = x_nchw.shape
    cout = params["w1"].shape[-1]
    cip = _padded_channels(cin, width)
    cop = _padded_channels(cout, width)
    wci, wco = width * cip, width * cop

    # ---- input: NCHW -> (N, H, W*cip) lane-dense bf16 slab (no spatial pad) ----
    x = jnp.transpose(x_nchw, (0, 2, 3, 1)).astype(jnp.float32)          # NHWC
    x = jnp.pad(x, ((0, 0), (0, 0), (0, 0), (0, cip - cin)))             # tiny channel pad
    x_slab = x.reshape(n, h, wci).astype(jnp.bfloat16)

    # ---- weights: fold kw (and W padding) into banded lane-dense matrices ----
    w1b = _band_weights(params["w1"], width, cip, cop).astype(jnp.bfloat16)
    w2b = _band_weights(params["w2"], width, cop, cop).astype(jnp.bfloat16)
    # Conv biases b1/b2 are NOT passed: exactly cancelled by training-mode BN.

    # per-channel "sum over w and broadcast" matrix for BN statistics
    t = jnp.kron(jnp.ones((width, width), jnp.float32),
                 jnp.eye(cop, dtype=jnp.float32))                        # (wco, wco)

    def tile_vec(v):  # gamma/beta broadcast over the folded w positions
        return jnp.tile(jnp.pad(v, (0, cop - cout)), width).reshape(1, wco).astype(jnp.float32)

    g1t, be1t = tile_vec(params["g1"]), tile_vec(params["be1"])
    g2t, be2t = tile_vec(params["g2"]), tile_vec(params["be2"])

    kernel = _make_double_conv_kernel(n, h, width, wci, wco)
    vmem = pl.BlockSpec(memory_space=pltpu.MemorySpace.VMEM)
    out_slab = pl.pallas_call(
        kernel,
        out_shape=jax.ShapeDtypeStruct((n, h, wco), jnp.float32),
        in_specs=[vmem] * 8,
        out_specs=vmem,
        compiler_params=pltpu.CompilerParams(vmem_limit_bytes=32 * 1024 * 1024),
    )(x_slab, w1b, w2b, t, g1t, be1t, g2t, be2t)

    # (N, H, W*cop) -> NCHW, dropping any padded channels
    out = out_slab.reshape(n, h, width, cop)[..., :cout]
    return jnp.transpose(out, (0, 3, 1, 2))


def _ref_conv_bn_relu(x_nchw, w, b, gamma, beta):
    """Pure-JAX f32 reference matching PyTorch Conv2d+BatchNorm2d(train)+ReLU."""
    w_oihw = jnp.transpose(w, (3, 2, 0, 1))
    y = jax.lax.conv_general_dilated(
        x_nchw, w_oihw, window_strides=(1, 1), padding=((1, 1), (1, 1)),
        dimension_numbers=("NCHW", "OIHW", "NCHW"))
    y = y + b[None, :, None, None]
    mean = jnp.mean(y, axis=(0, 2, 3), keepdims=True)
    var = jnp.mean((y - mean) ** 2, axis=(0, 2, 3), keepdims=True)
    y = (y - mean) / jnp.sqrt(var + _EPS)
    y = y * gamma[None, :, None, None] + beta[None, :, None, None]
    return jnp.maximum(y, 0.0)


if __name__ == "__main__":
    N, Cin, Cout, H, W = 2, 4, 8, 16, 16

    key = jax.random.PRNGKey(0)
    ks = jax.random.split(key, 9)
    params = {
        "w1": 0.1 * jax.random.normal(ks[0], (3, 3, Cin, Cout), jnp.float32),
        "b1": 0.1 * jax.random.normal(ks[1], (Cout,), jnp.float32),
        "g1": 1.0 + 0.1 * jax.random.normal(ks[2], (Cout,), jnp.float32),
        "be1": 0.1 * jax.random.normal(ks[3], (Cout,), jnp.float32),
        "w2": 0.1 * jax.random.normal(ks[4], (3, 3, Cout, Cout), jnp.float32),
        "b2": 0.1 * jax.random.normal(ks[5], (Cout,), jnp.float32),
        "g2": 1.0 + 0.1 * jax.random.normal(ks[6], (Cout,), jnp.float32),
        "be2": 0.1 * jax.random.normal(ks[7], (Cout,), jnp.float32),
    }
    x = jax.random.normal(ks[8], (N, Cin, H, W), jnp.float32)

    out = jax.block_until_ready(double_conv(x, params))

    ref = _ref_conv_bn_relu(x, params["w1"], params["b1"], params["g1"], params["be1"])
    ref = _ref_conv_bn_relu(ref, params["w2"], params["b2"], params["g2"], params["be2"])
    # Tolerance reflects bf16 MXU matmul inputs (f32 accumulation / f32 BN math).
    np.testing.assert_allclose(np.asarray(out), np.asarray(ref), rtol=5e-2, atol=5e-2)

    print("KERNEL_OK")
</pallas_src>

<mosaic_0001>
module attributes {stable_mosaic.version = 11 : i64} {
  func.func @kernel(%arg0: memref<2x16x128xbf16, #tpu.memory_space<vmem>>, %arg1: memref<3x128x128xbf16, #tpu.memory_space<vmem>>, %arg2: memref<3x128x128xbf16, #tpu.memory_space<vmem>>, %arg3: memref<128x128xf32, #tpu.memory_space<vmem>>, %arg4: memref<1x128xf32, #tpu.memory_space<vmem>>, %arg5: memref<1x128xf32, #tpu.memory_space<vmem>>, %arg6: memref<1x128xf32, #tpu.memory_space<vmem>>, %arg7: memref<1x128xf32, #tpu.memory_space<vmem>>, %arg8: memref<2x16x128xf32, #tpu.memory_space<vmem>>) attributes {dimension_semantics = [], scalar_prefetch = 0 : i64, scratch_operands = 0 : i64, tpu.core_type = #tpu.core_type<tc>} {
    %c0 = arith.constant 0 : index
    %c0_0 = arith.constant 0 : index
    %c0_1 = arith.constant 0 : index
    %0 = vector.load %arg0[%c0, %c0_0, %c0_1] : memref<2x16x128xbf16, #tpu.memory_space<vmem>>, vector<2x16x128xbf16>
    %1 = arith.extf %0 : vector<2x16x128xbf16> to vector<2x16x128xf32>
    %cst = arith.constant 0.000000e+00 : f32
    %2 = vector.broadcast %cst : f32 to vector<2x1x128xf32>
    %3 = tpu.concatenate %2, %1, %2 in 1 : vector<2x1x128xf32>, vector<2x16x128xf32>, vector<2x1x128xf32> -> vector<2x18x128xf32>
    %cst_2 = arith.constant 0.000000e+00 : f32
    %4 = vector.broadcast %cst_2 : f32 to vector<32x128xf32>
    %5 = vector.extract_strided_slice %3 {offsets = [0, 0, 0], sizes = [2, 16, 128], strides = [1, 1, 1]} : vector<2x18x128xf32> to vector<2x16x128xf32>
    %6 = vector.shape_cast %5 : vector<2x16x128xf32> to vector<32x128xf32>
    %7 = arith.truncf %6 : vector<32x128xf32> to vector<32x128xbf16>
    %c0_3 = arith.constant 0 : index
    %c0_4 = arith.constant 0 : index
    %c0_5 = arith.constant 0 : index
    %8 = vector.load %arg1[%c0_3, %c0_4, %c0_5] : memref<3x128x128xbf16, #tpu.memory_space<vmem>>, vector<1x128x128xbf16>
    %9 = vector.shape_cast %8 : vector<1x128x128xbf16> to vector<128x128xbf16>
    %cst_6 = arith.constant dense<0.000000e+00> : vector<32x128xf32>
    %10 = tpu.matmul %7, %9, %cst_6 {dimension_numbers = #tpu.dot_dimension_numbers<[1], [0], [0], [1], [0, 0, 1, 1], [], []>} : vector<32x128xbf16>, vector<128x128xbf16>, vector<32x128xf32> -> vector<32x128xf32>
    %11 = arith.addf %4, %10 : vector<32x128xf32>
    %12 = vector.extract_strided_slice %3 {offsets = [0, 1, 0], sizes = [2, 16, 128], strides = [1, 1, 1]} : vector<2x18x128xf32> to vector<2x16x128xf32>
    %13 = vector.shape_cast %12 : vector<2x16x128xf32> to vector<32x128xf32>
    %14 = arith.truncf %13 : vector<32x128xf32> to vector<32x128xbf16>
    %c1 = arith.constant 1 : index
    %c0_7 = arith.constant 0 : index
    %c0_8 = arith.constant 0 : index
    %15 = vector.load %arg1[%c1, %c0_7, %c0_8] : memref<3x128x128xbf16, #tpu.memory_space<vmem>>, vector<1x128x128xbf16>
    %16 = vector.shape_cast %15 : vector<1x128x128xbf16> to vector<128x128xbf16>
    %cst_9 = arith.constant dense<0.000000e+00> : vector<32x128xf32>
    %17 = tpu.matmul %14, %16, %cst_9 {dimension_numbers = #tpu.dot_dimension_numbers<[1], [0], [0], [1], [0, 0, 1, 1], [], []>} : vector<32x128xbf16>, vector<128x128xbf16>, vector<32x128xf32> -> vector<32x128xf32>
    %18 = arith.addf %11, %17 : vector<32x128xf32>
    %19 = vector.extract_strided_slice %3 {offsets = [0, 2, 0], sizes = [2, 16, 128], strides = [1, 1, 1]} : vector<2x18x128xf32> to vector<2x16x128xf32>
    %20 = vector.shape_cast %19 : vector<2x16x128xf32> to vector<32x128xf32>
    %21 = arith.truncf %20 : vector<32x128xf32> to vector<32x128xbf16>
    %c2 = arith.constant 2 : index
    %c0_10 = arith.constant 0 : index
    %c0_11 = arith.constant 0 : index
    %22 = vector.load %arg1[%c2, %c0_10, %c0_11] : memref<3x128x128xbf16, #tpu.memory_space<vmem>>, vector<1x128x128xbf16>
    %23 = vector.shape_cast %22 : vector<1x128x128xbf16> to vector<128x128xbf16>
    %cst_12 = arith.constant dense<0.000000e+00> : vector<32x128xf32>
    %24 = tpu.matmul %21, %23, %cst_12 {dimension_numbers = #tpu.dot_dimension_numbers<[1], [0], [0], [1], [0, 0, 1, 1], [], []>} : vector<32x128xbf16>, vector<128x128xbf16>, vector<32x128xf32> -> vector<32x128xf32>
    %25 = arith.addf %18, %24 : vector<32x128xf32>
    %cst_13 = arith.constant dense<0.000000e+00> : vector<128xf32>
    %26 = vector.multi_reduction <add>, %25, %cst_13 [0] : vector<32x128xf32> to vector<128xf32>
    %27 = vector.shape_cast %26 : vector<128xf32> to vector<1x128xf32>
    %c0_14 = arith.constant 0 : index
    %c0_15 = arith.constant 0 : index
    %28 = vector.load %arg3[%c0_14, %c0_15] : memref<128x128xf32, #tpu.memory_space<vmem>>, vector<128x128xf32>
    %cst_16 = arith.constant dense<0.000000e+00> : vector<1x128xf32>
    %29 = tpu.matmul %27, %28, %cst_16 {dimension_numbers = #tpu.dot_dimension_numbers<[1], [0], [0], [1], [0, 0, 1, 1], [], []>} : vector<1x128xf32>, vector<128x128xf32>, vector<1x128xf32> -> vector<1x128xf32>
    %cst_17 = arith.constant 0.001953125 : f32
    %30 = vector.broadcast %cst_17 : f32 to vector<1x128xf32>
    %31 = arith.mulf %29, %30 : vector<1x128xf32>
    %32 = vector.broadcast %31 : vector<1x128xf32> to vector<32x128xf32>
    %33 = arith.subf %25, %32 : vector<32x128xf32>
    %34 = arith.mulf %33, %33 : vector<32x128xf32>
    %cst_18 = arith.constant dense<0.000000e+00> : vector<128xf32>
    %35 = vector.multi_reduction <add>, %34, %cst_18 [0] : vector<32x128xf32> to vector<128xf32>
    %36 = vector.shape_cast %35 : vector<128xf32> to vector<1x128xf32>
    %c0_19 = arith.constant 0 : index
    %c0_20 = arith.constant 0 : index
    %37 = vector.load %arg3[%c0_19, %c0_20] : memref<128x128xf32, #tpu.memory_space<vmem>>, vector<128x128xf32>
    %cst_21 = arith.constant dense<0.000000e+00> : vector<1x128xf32>
    %38 = tpu.matmul %36, %37, %cst_21 {dimension_numbers = #tpu.dot_dimension_numbers<[1], [0], [0], [1], [0, 0, 1, 1], [], []>} : vector<1x128xf32>, vector<128x128xf32>, vector<1x128xf32> -> vector<1x128xf32>
    %cst_22 = arith.constant 0.001953125 : f32
    %39 = vector.broadcast %cst_22 : f32 to vector<1x128xf32>
    %40 = arith.mulf %38, %39 : vector<1x128xf32>
    %cst_23 = arith.constant 9.99999974E-6 : f32
    %41 = vector.broadcast %cst_23 : f32 to vector<1x128xf32>
    %42 = arith.addf %40, %41 : vector<1x128xf32>
    %43 = math.rsqrt %42 : vector<1x128xf32>
    %44 = vector.broadcast %43 : vector<1x128xf32> to vector<32x128xf32>
    %45 = arith.mulf %33, %44 : vector<32x128xf32>
    %c0_24 = arith.constant 0 : index
    %c0_25 = arith.constant 0 : index
    %46 = vector.load %arg4[%c0_24, %c0_25] : memref<1x128xf32, #tpu.memory_space<vmem>>, vector<1x128xf32>
    %47 = vector.broadcast %46 : vector<1x128xf32> to vector<32x128xf32>
    %48 = arith.mulf %45, %47 : vector<32x128xf32>
    %c0_26 = arith.constant 0 : index
    %c0_27 = arith.constant 0 : index
    %49 = vector.load %arg5[%c0_26, %c0_27] : memref<1x128xf32, #tpu.memory_space<vmem>>, vector<1x128xf32>
    %50 = vector.broadcast %49 : vector<1x128xf32> to vector<32x128xf32>
    %51 = arith.addf %48, %50 : vector<32x128xf32>
    %cst_28 = arith.constant 0.000000e+00 : f32
    %52 = vector.broadcast %cst_28 : f32 to vector<32x128xf32>
    %53 = arith.maximumf %51, %52 : vector<32x128xf32>
    %54 = vector.shape_cast %53 : vector<32x128xf32> to vector<2x16x128xf32>
    %cst_29 = arith.constant 0.000000e+00 : f32
    %55 = vector.broadcast %cst_29 : f32 to vector<2x1x128xf32>
    %56 = tpu.concatenate %55, %54, %55 in 1 : vector<2x1x128xf32>, vector<2x16x128xf32>, vector<2x1x128xf32> -> vector<2x18x128xf32>
    %cst_30 = arith.constant 0.000000e+00 : f32
    %57 = vector.broadcast %cst_30 : f32 to vector<32x128xf32>
    %58 = vector.extract_strided_slice %56 {offsets = [0, 0, 0], sizes = [2, 16, 128], strides = [1, 1, 1]} : vector<2x18x128xf32> to vector<2x16x128xf32>
    %59 = vector.shape_cast %58 : vector<2x16x128xf32> to vector<32x128xf32>
    %60 = arith.truncf %59 : vector<32x128xf32> to vector<32x128xbf16>
    %c0_31 = arith.constant 0 : index
    %c0_32 = arith.constant 0 : index
    %c0_33 = arith.constant 0 : index
    %61 = vector.load %arg2[%c0_31, %c0_32, %c0_33] : memref<3x128x128xbf16, #tpu.memory_space<vmem>>, vector<1x128x128xbf16>
    %62 = vector.shape_cast %61 : vector<1x128x128xbf16> to vector<128x128xbf16>
    %cst_34 = arith.constant dense<0.000000e+00> : vector<32x128xf32>
    %63 = tpu.matmul %60, %62, %cst_34 {dimension_numbers = #tpu.dot_dimension_numbers<[1], [0], [0], [1], [0, 0, 1, 1], [], []>} : vector<32x128xbf16>, vector<128x128xbf16>, vector<32x128xf32> -> vector<32x128xf32>
    %64 = arith.addf %57, %63 : vector<32x128xf32>
    %65 = vector.extract_strided_slice %56 {offsets = [0, 1, 0], sizes = [2, 16, 128], strides = [1, 1, 1]} : vector<2x18x128xf32> to vector<2x16x128xf32>
    %66 = vector.shape_cast %65 : vector<2x16x128xf32> to vector<32x128xf32>
    %67 = arith.truncf %66 : vector<32x128xf32> to vector<32x128xbf16>
    %c1_35 = arith.constant 1 : index
    %c0_36 = arith.constant 0 : index
    %c0_37 = arith.constant 0 : index
    %68 = vector.load %arg2[%c1_35, %c0_36, %c0_37] : memref<3x128x128xbf16, #tpu.memory_space<vmem>>, vector<1x128x128xbf16>
    %69 = vector.shape_cast %68 : vector<1x128x128xbf16> to vector<128x128xbf16>
    %cst_38 = arith.constant dense<0.000000e+00> : vector<32x128xf32>
    %70 = tpu.matmul %67, %69, %cst_38 {dimension_numbers = #tpu.dot_dimension_numbers<[1], [0], [0], [1], [0, 0, 1, 1], [], []>} : vector<32x128xbf16>, vector<128x128xbf16>, vector<32x128xf32> -> vector<32x128xf32>
    %71 = arith.addf %64, %70 : vector<32x128xf32>
    %72 = vector.extract_strided_slice %56 {offsets = [0, 2, 0], sizes = [2, 16, 128], strides = [1, 1, 1]} : vector<2x18x128xf32> to vector<2x16x128xf32>
    %73 = vector.shape_cast %72 : vector<2x16x128xf32> to vector<32x128xf32>
    %74 = arith.truncf %73 : vector<32x128xf32> to vector<32x128xbf16>
    %c2_39 = arith.constant 2 : index
    %c0_40 = arith.constant 0 : index
    %c0_41 = arith.constant 0 : index
    %75 = vector.load %arg2[%c2_39, %c0_40, %c0_41] : memref<3x128x128xbf16, #tpu.memory_space<vmem>>, vector<1x128x128xbf16>
    %76 = vector.shape_cast %75 : vector<1x128x128xbf16> to vector<128x128xbf16>
    %cst_42 = arith.constant dense<0.000000e+00> : vector<32x128xf32>
    %77 = tpu.matmul %74, %76, %cst_42 {dimension_numbers = #tpu.dot_dimension_numbers<[1], [0], [0], [1], [0, 0, 1, 1], [], []>} : vector<32x128xbf16>, vector<128x128xbf16>, vector<32x128xf32> -> vector<32x128xf32>
    %78 = arith.addf %71, %77 : vector<32x128xf32>
    %cst_43 = arith.constant dense<0.000000e+00> : vector<128xf32>
    %79 = vector.multi_reduction <add>, %78, %cst_43 [0] : vector<32x128xf32> to vector<128xf32>
    %80 = vector.shape_cast %79 : vector<128xf32> to vector<1x128xf32>
    %c0_44 = arith.constant 0 : index
    %c0_45 = arith.constant 0 : index
    %81 = vector.load %arg3[%c0_44, %c0_45] : memref<128x128xf32, #tpu.memory_space<vmem>>, vector<128x128xf32>
    %cst_46 = arith.constant dense<0.000000e+00> : vector<1x128xf32>
    %82 = tpu.matmul %80, %81, %cst_46 {dimension_numbers = #tpu.dot_dimension_numbers<[1], [0], [0], [1], [0, 0, 1, 1], [], []>} : vector<1x128xf32>, vector<128x128xf32>, vector<1x128xf32> -> vector<1x128xf32>
    %cst_47 = arith.constant 0.001953125 : f32
    %83 = vector.broadcast %cst_47 : f32 to vector<1x128xf32>
    %84 = arith.mulf %82, %83 : vector<1x128xf32>
    %85 = vector.broadcast %84 : vector<1x128xf32> to vector<32x128xf32>
    %86 = arith.subf %78, %85 : vector<32x128xf32>
    %87 = arith.mulf %86, %86 : vector<32x128xf32>
    %cst_48 = arith.constant dense<0.000000e+00> : vector<128xf32>
    %88 = vector.multi_reduction <add>, %87, %cst_48 [0] : vector<32x128xf32> to vector<128xf32>
    %89 = vector.shape_cast %88 : vector<128xf32> to vector<1x128xf32>
    %c0_49 = arith.constant 0 : index
    %c0_50 = arith.constant 0 : index
    %90 = vector.load %arg3[%c0_49, %c0_50] : memref<128x128xf32, #tpu.memory_space<vmem>>, vector<128x128xf32>
    %cst_51 = arith.constant dense<0.000000e+00> : vector<1x128xf32>
    %91 = tpu.matmul %89, %90, %cst_51 {dimension_numbers = #tpu.dot_dimension_numbers<[1], [0], [0], [1], [0, 0, 1, 1], [], []>} : vector<1x128xf32>, vector<128x128xf32>, vector<1x128xf32> -> vector<1x128xf32>
    %cst_52 = arith.constant 0.001953125 : f32
    %92 = vector.broadcast %cst_52 : f32 to vector<1x128xf32>
    %93 = arith.mulf %91, %92 : vector<1x128xf32>
    %cst_53 = arith.constant 9.99999974E-6 : f32
    %94 = vector.broadcast %cst_53 : f32 to vector<1x128xf32>
    %95 = arith.addf %93, %94 : vector<1x128xf32>
    %96 = math.rsqrt %95 : vector<1x128xf32>
    %97 = vector.broadcast %96 : vector<1x128xf32> to vector<32x128xf32>
    %98 = arith.mulf %86, %97 : vector<32x128xf32>
    %c0_54 = arith.constant 0 : index
    %c0_55 = arith.constant 0 : index
    %99 = vector.load %arg6[%c0_54, %c0_55] : memref<1x128xf32, #tpu.memory_space<vmem>>, vector<1x128xf32>
    %100 = vector.broadcast %99 : vector<1x128xf32> to vector<32x128xf32>
    %101 = arith.mulf %98, %100 : vector<32x128xf32>
    %c0_56 = arith.constant 0 : index
    %c0_57 = arith.constant 0 : index
    %102 = vector.load %arg7[%c0_56, %c0_57] : memref<1x128xf32, #tpu.memory_space<vmem>>, vector<1x128xf32>
    %103 = vector.broadcast %102 : vector<1x128xf32> to vector<32x128xf32>
    %104 = arith.addf %101, %103 : vector<32x128xf32>
    %cst_58 = arith.constant 0.000000e+00 : f32
    %105 = vector.broadcast %cst_58 : f32 to vector<32x128xf32>
    %106 = arith.maximumf %104, %105 : vector<32x128xf32>
    %107 = vector.shape_cast %106 : vector<32x128xf32> to vector<2x16x128xf32>
    %c0_59 = arith.constant 0 : index
    %c0_60 = arith.constant 0 : index
    %c0_61 = arith.constant 0 : index
    %108 = vector.load %arg8[%c0_59, %c0_60, %c0_61] : memref<2x16x128xf32, #tpu.memory_space<vmem>>, vector<2x16x128xf32>
    tpu.vector_store %arg8[%c0_59, %c0_60, %c0_61], %107 {strides = array<i32>} : memref<2x16x128xf32, #tpu.memory_space<vmem>>, vector<2x16x128xf32>,
    return
  }
}

</mosaic_0001>

<llo_original>
// kernel: tile.23
$region0: #{tile.23}
  #allocation0 [shape = 's32[1]{0}', space=sflag, size = 0x4, scoped, tag = 'scoped memory for tile.23']
  %s0 = inlined_call_operand.vmem [shape: f32[8], index: 0, kind: input, shape index: {}]
  %s1 = inlined_call_operand.vmem [shape: f32[16,8], index: 1, kind: output, shape index: {}]
  // Predicated region
  $region2: #{tile.23} parent=0 // pred_check
    _
  $region3: #{tile.23} parent=0 // pred_check_branch
    %3 = sbr.rel (0) target = $region5
  $region4: #{tile.23} parent=0 // pred_region
    _
  $region5: #{tile.23} parent=0 // pred_fallthru
    _
  %v4 = vld [vmem:[%s0] ss:$0 sm:$0xff]
  %5 = vst [vmem:[%s1] sm:$0xff] %v4
  %s6 = scalar_lea.vmem %s1, 8
  %7 = vst [vmem:[%s6] sm:$0xff] %v4

// kernel: tile.24
$region0: #{tile.24}
  %s0 = inlined_call_operand.vmem [shape: f32[16,8], index: 0, kind: input, shape index: {}]
  %s1 = inlined_call_operand.vmem [shape: f32[1,128], index: 1, kind: output, shape index: {}]
  $region1: #{tile.24} parent=0
    #allocation0 [shape = 'u8[4096]{0}', space=vmem, size = 0x1000, scoped, tag = 'scoped mem for output reshape']
    %v2 = vld [vmem:[%s0] sm:$0x1]
    %vm3 = vcmask 64512
    %4 = vst.msk [vmem:[#allocation0] sm:$0x1] %vm3, %v2
    %s5 = scalar_lea.vmem %s0, 15
    %v6 = vld [vmem:[%s5] sm:$0x1]
    %7 = vrot.lane.b32.xlu0 %v6, 120
    %v8 = vpop.permute.xlu0 %7
    %vm9 = vcmask 1048512
    %10 = vst.msk [vmem:[#allocation0] sm:$0x1] %vm9, %v8
    %s11 = scalar_lea.vmem %s0, 14
    %v12 = vld [vmem:[%s11] sm:$0x1]
    %13 = vrot.lane.b32.xlu0 %v12, 112
    %v14 = vpop.permute.xlu0 %13
    %vm15 = vcmask 982912
    %16 = vst.msk [vmem:[#allocation0] sm:$0x1] %vm15, %v14
    %s17 = scalar_lea.vmem %s0, 13
    %v18 = vld [vmem:[%s17] sm:$0x1]
    %19 = vrot.lane.b32.xlu0 %v18, 104
    %v20 = vpop.permute.xlu0 %19
    %vm21 = vcmask 917312
    %22 = vst.msk [vmem:[#allocation0] sm:$0x1] %vm21, %v20
    %s23 = scalar_lea.vmem %s0, 12
    %v24 = vld [vmem:[%s23] sm:$0x1]
    %25 = vrot.lane.b32.xlu0 %v24, 96
    %v26 = vpop.permute.xlu0 %25
    %vm27 = vcmask 851712
    %28 = vst.msk [vmem:[#allocation0] sm:$0x1] %vm27, %v26
    %s29 = scalar_lea.vmem %s0, 11
    %v30 = vld [vmem:[%s29] sm:$0x1]
    %31 = vrot.lane.b32.xlu0 %v30, 88
    %v32 = vpop.permute.xlu0 %31
    %vm33 = vcmask 786112
    %34 = vst.msk [vmem:[#allocation0] sm:$0x1] %vm33, %v32
    %s35 = scalar_lea.vmem %s0, 10
    %v36 = vld [vmem:[%s35] sm:$0x1]
    %37 = vrot.lane.b32.xlu0 %v36, 80
    %v38 = vpop.permute.xlu0 %37
    %vm39 = vcmask 720512
    %40 = vst.msk [vmem:[#allocation0] sm:$0x1] %vm39, %v38
    %s41 = scalar_lea.vmem %s0, 9
    %v42 = vld [vmem:[%s41] sm:$0x1]
    %43 = vrot.lane.b32.xlu0 %v42, 72
    %v44 = vpop.permute.xlu0 %43
    %vm45 = vcmask 654912
    %46 = vst.msk [vmem:[#allocation0] sm:$0x1] %vm45, %v44
    %s47 = scalar_lea.vmem %s0, 8
    %v48 = vld [vmem:[%s47] sm:$0x1]
    %49 = vrot.lane.b32.xlu0 %v48, 64
    %v50 = vpop.permute.xlu0 %49
    %vm51 = vcmask 589312
    %52 = vst.msk [vmem:[#allocation0] sm:$0x1] %vm51, %v50
    %s53 = scalar_lea.vmem %s0, 7
    %v54 = vld [vmem:[%s53] sm:$0x1]
    %55 = vrot.lane.b32.xlu0 %v54, 56
    %v56 = vpop.permute.xlu0 %55
    %vm57 = vcmask 523712
    %58 = vst.msk [vmem:[#allocation0] sm:$0x1] %vm57, %v56
    %s59 = scalar_lea.vmem %s0, 6
    %v60 = vld [vmem:[%s59] sm:$0x1]
    %61 = vrot.lane.b32.xlu0 %v60, 48
    %v62 = vpop.permute.xlu0 %61
    %vm63 = vcmask 458112
    %64 = vst.msk [vmem:[#allocation0] sm:$0x1] %vm63, %v62
    %s65 = scalar_lea.vmem %s0, 5
    %v66 = vld [vmem:[%s65] sm:$0x1]
    %67 = vrot.lane.b32.xlu0 %v66, 40
    %v68 = vpop.permute.xlu0 %67
    %vm69 = vcmask 392512
    %70 = vst.msk [vmem:[#allocation0] sm:$0x1] %vm69, %v68
    %s71 = scalar_lea.vmem %s0, 4
    %v72 = vld [vmem:[%s71] sm:$0x1]
    %73 = vrot.lane.b32.xlu0 %v72, 32
    %v74 = vpop.permute.xlu0 %73
    %vm75 = vcmask 326912
    %76 = vst.msk [vmem:[#allocation0] sm:$0x1] %vm75, %v74
    %s77 = scalar_lea.vmem %s0, 3
    %v78 = vld [vmem:[%s77] sm:$0x1]
    %79 = vrot.lane.b32.xlu0 %v78, 24
    %v80 = vpop.permute.xlu0 %79
    %vm81 = vcmask 261312
    %82 = vst.msk [vmem:[#allocation0] sm:$0x1] %vm81, %v80
    %s83 = scalar_lea.vmem %s0, 2
    %v84 = vld [vmem:[%s83] sm:$0x1]
    %85 = vrot.lane.b32.xlu0 %v84, 16
    %v86 = vpop.permute.xlu0 %85
    %vm87 = vcmask 195712
    %88 = vst.msk [vmem:[#allocation0] sm:$0x1] %vm87, %v86
    %s89 = scalar_lea.vmem %s0, 1
    %v90 = vld [vmem:[%s89] sm:$0x1]
    %91 = vrot.lane.b32.xlu0 %v90, 8
    %v92 = vpop.permute.xlu0 %91
    %vm93 = vcmask 130112
    %94 = vst.msk [vmem:[#allocation0] sm:$0x1] %vm93, %v92
    %s96 = sshllo.u32 0, 1
    %v98 = vld [vmem:[#allocation0] sm:%s96]
    %s99 = sshllo.u32 0, 1
    %100 = vst [vmem:[%s1] sm:%s99] %v98

// kernel: double_conv.1
$region0: #{double_conv.1}
  #allocation0 [shape = 'u32[]', space=smem, size = 0x4, offset = 0x4, fixed_abs, tag = 'smem constant byte address 0x4 - core index']
  #allocation1 [shape = 'u32[144,128]{1,0:T(1,128)}', space=vmem, size = 0x12000, scoped, tag = 'internal scratch']
  %s0 = inlined_call_operand.vmem [shape: bf16[2,16,128], index: 0, kind: input, shape index: {}]
  %s1 = inlined_call_operand.vmem [shape: bf16[3,128,128], index: 1, kind: input, shape index: {}]
  %s2 = inlined_call_operand.vmem [shape: bf16[3,128,128], index: 2, kind: input, shape index: {}]
  %s3 = inlined_call_operand.vmem [shape: f32[128,128], index: 3, kind: input, shape index: {}]
  %s4 = inlined_call_operand.vmem [shape: f32[1,128], index: 4, kind: input, shape index: {}]
  %s5 = inlined_call_operand.vmem [shape: f32[1,128], index: 5, kind: input, shape index: {}]
  %s6 = inlined_call_operand.vmem [shape: f32[1,128], index: 6, kind: input, shape index: {}]
  %s7 = inlined_call_operand.vmem [shape: f32[1,128], index: 7, kind: input, shape index: {}]
  %s8 = inlined_call_operand.vmem [shape: f32[2,16,128], index: 8, kind: output, shape index: {}]
  %s9 = sld [smem:[#allocation0]]
  $region42: #{double_conv.1} parent=0
    _
  %s11 = ssub.s32 1, %s9
  %s12 = scalar_select 0, %s11, %s9
  // Predicated region
  $region2: #{double_conv.1} parent=0 // pred_check
    _
  $region3: #{double_conv.1} parent=0 // pred_check_branch
    %14 = sbr.rel (0) target = $region5
  $region4: #{double_conv.1} parent=0 // pred_region
    _
  $region5: #{double_conv.1} parent=0 // pred_fallthru
    _
  // Predicated region
  $region6: #{double_conv.1} parent=0 // pred_check
    _
  $region7: #{double_conv.1} parent=0 // pred_check_branch
    %16 = sbr.rel (0) target = $region9
  $region8: #{double_conv.1} parent=0 // pred_region
    _
  $region9: #{double_conv.1} parent=0 // pred_fallthru
    _
  // Predicated region
  $region10: #{double_conv.1} parent=0 // pred_check
    _
  $region11: #{double_conv.1} parent=0 // pred_check_branch
    %18 = sbr.rel (0) target = $region13
  $region12: #{double_conv.1} parent=0 // pred_region
    _
  $region13: #{double_conv.1} parent=0 // pred_fallthru
    _
  // Predicated region
  $region14: #{double_conv.1} parent=0 // pred_check
    _
  $region15: #{double_conv.1} parent=0 // pred_check_branch
    %20 = sbr.rel (0) target = $region17
  $region16: #{double_conv.1} parent=0 // pred_region
    _
  $region17: #{double_conv.1} parent=0 // pred_fallthru
    _
  // Predicated region
  $region18: #{double_conv.1} parent=0 // pred_check
    _
  $region19: #{double_conv.1} parent=0 // pred_check_branch
    %22 = sbr.rel (0) target = $region21
  $region20: #{double_conv.1} parent=0 // pred_region
    _
  $region21: #{double_conv.1} parent=0 // pred_fallthru
    _
  // Predicated region
  $region22: #{double_conv.1} parent=0 // pred_check
    _
  $region23: #{double_conv.1} parent=0 // pred_check_branch
    %24 = sbr.rel (0) target = $region25
  $region24: #{double_conv.1} parent=0 // pred_region
    _
  $region25: #{double_conv.1} parent=0 // pred_fallthru
    _
  // Predicated region
  $region26: #{double_conv.1} parent=0 // pred_check
    _
  $region27: #{double_conv.1} parent=0 // pred_check_branch
    %26 = sbr.rel (0) target = $region29
  $region28: #{double_conv.1} parent=0 // pred_region
    _
  $region29: #{double_conv.1} parent=0 // pred_fallthru
    _
  // Predicated region
  $region30: #{double_conv.1} parent=0 // pred_check
    _
  $region31: #{double_conv.1} parent=0 // pred_check_branch
    %28 = sbr.rel (0) target = $region33
  $region32: #{double_conv.1} parent=0 // pred_region
    _
  $region33: #{double_conv.1} parent=0 // pred_fallthru
    _
  %v30 = vld [vmem:[%s0] sm:$0xf]
  %v31 = vld [vmem:[%s0 + $0x4] sm:$0xf]
  %v32 = vld [vmem:[%s0 + $0x8] sm:$0xf]
  %v33 = vld [vmem:[%s0 + $0xc] sm:$0xf]
  %v34 = vunpack.c.l.bf16 %v30
  %v35 = vunpack.c.l.bf16 %v31
  %v36 = vunpack.c.l.bf16 %v32
  %v37 = vunpack.c.l.bf16 %v33
  %vm42 = vcmask 1040384
  %v43 = vrot.slane %v34, 7
  %v44 = vrot.slane %v35, 7
  %v45 = vsel %vm42, %v43, %v44
  %v46 = vrot.slane %v36, 7
  %v47 = vrot.slane %v37, 7
  %v48 = vsel %vm42, %v46, %v47
  %v55 = vsel %vm42, 0.0, %v43
  %v56 = vsel %vm42, 0.0, %v46
  %v57 = vsel %vm42, %v44, 0.0
  %v58 = vsel %vm42, %v47, 0.0
  %v59 = vpack.c.bf16 %v45, %v55
  %v60 = vpack.c.bf16 %v48, %v56
  %v61 = vld [vmem:[%s1] sm:$0xf]
  %v62 = vld [vmem:[%s1 + $0x4] sm:$0xf]
  %v63 = vld [vmem:[%s1 + $0x8] sm:$0xf]
  %v64 = vld [vmem:[%s1 + $0xc] sm:$0xf]
  %v65 = vld [vmem:[%s1 + $0x10] sm:$0xf]
  %v66 = vld [vmem:[%s1 + $0x14] sm:$0xf]
  %v67 = vld [vmem:[%s1 + $0x18] sm:$0xf]
  %v68 = vld [vmem:[%s1 + $0x1c] sm:$0xf]
  %v69 = vld [vmem:[%s1 + $0x20] sm:$0xf]
  %v70 = vld [vmem:[%s1 + $0x24] sm:$0xf]
  %v71 = vld [vmem:[%s1 + $0x28] sm:$0xf]
  %v72 = vld [vmem:[%s1 + $0x2c] sm:$0xf]
  %v73 = vld [vmem:[%s1 + $0x30] sm:$0xf]
  %v74 = vld [vmem:[%s1 + $0x34] sm:$0xf]
  %v75 = vld [vmem:[%s1 + $0x38] sm:$0xf]
  %v76 = vld [vmem:[%s1 + $0x3c] sm:$0xf]
  %vm81 = vcmask 1046528
  %v82 = vrot.slane %v55, 1
  %v83 = vrot.slane %v45, 1
  %v84 = vsel %vm81, %v82, %v83
  %v85 = vrot.slane %v57, 1
  %v86 = vsel %vm81, %v83, %v85
  %v87 = vrot.slane %v56, 1
  %v88 = vrot.slane %v48, 1
  %v89 = vsel %vm81, %v87, %v88
  %v90 = vrot.slane %v58, 1
  %v91 = vsel %vm81, %v88, %v90
  %v96 = vpack.c.bf16 %v86, %v84
  %v97 = vpack.c.bf16 %v91, %v89
  %s98 = scalar_lea.vmem %s1, 64
  %v99 = vld [vmem:[%s98] sm:$0xf]
  %v100 = vld [vmem:[%s98 + $0x4] sm:$0xf]
  %v101 = vld [vmem:[%s98 + $0x8] sm:$0xf]
  %v102 = vld [vmem:[%s98 + $0xc] sm:$0xf]
  %v103 = vld [vmem:[%s98 + $0x10] sm:$0xf]
  %v104 = vld [vmem:[%s98 + $0x14] sm:$0xf]
  %v105 = vld [vmem:[%s98 + $0x18] sm:$0xf]
  %v106 = vld [vmem:[%s98 + $0x1c] sm:$0xf]
  %v107 = vld [vmem:[%s98 + $0x20] sm:$0xf]
  %v108 = vld [vmem:[%s98 + $0x24] sm:$0xf]
  %v109 = vld [vmem:[%s98 + $0x28] sm:$0xf]
  %v110 = vld [vmem:[%s98 + $0x2c] sm:$0xf]
  %v111 = vld [vmem:[%s98 + $0x30] sm:$0xf]
  %v112 = vld [vmem:[%s98 + $0x34] sm:$0xf]
  %v113 = vld [vmem:[%s98 + $0x38] sm:$0xf]
  %v114 = vld [vmem:[%s98 + $0x3c] sm:$0xf]
  %v131 = vunpack.c.l.b16 %v99
  %v132 = vunpack.c.l.b16 %v100
  %v133 = vunpack.c.l.b16 %v101
  %v134 = vunpack.c.l.b16 %v102
  %v135 = vunpack.c.l.b16 %v103
  %v136 = vunpack.c.l.b16 %v104
  %v137 = vunpack.c.l.b16 %v105
  %v138 = vunpack.c.l.b16 %v106
  %v139 = vunpack.c.l.b16 %v107
  %v140 = vunpack.c.l.b16 %v108
  %v141 = vunpack.c.l.b16 %v109
  %v142 = vunpack.c.l.b16 %v110
  %v143 = vunpack.c.l.b16 %v111
  %v144 = vunpack.c.l.b16 %v112
  %v145 = vunpack.c.l.b16 %v113
  %v146 = vunpack.c.l.b16 %v114
  %v147 = vpack.c.b16 %v132, %v131
  %v148 = vpack.c.b16 %v134, %v133
  %v149 = vpack.c.b16 %v136, %v135
  %v150 = vpack.c.b16 %v138, %v137
  %v151 = vpack.c.b16 %v140, %v139
  %v152 = vpack.c.b16 %v142, %v141
  %v153 = vpack.c.b16 %v144, %v143
  %v154 = vpack.c.b16 %v146, %v145
  %163 = vmatprep.subr.bf16.mxu0 0
  %164 = vmatpush1.bf16.msra.mxu0 %v147
  %165 = vmatprep.subr.bf16.mxu0 0
  %166 = vmatpush1.bf16.msra.mxu0 %v148
  %167 = vmatprep.subr.bf16.mxu0 0
  %168 = vmatpush1.bf16.msra.mxu0 %v149
  %169 = vmatprep.subr.bf16.mxu0 0
  %170 = vmatpush1.bf16.msra.mxu0 %v150
  %171 = vmatprep.subr.bf16.mxu0 0
  %172 = vmatpush1.bf16.msra.mxu0 %v151
  %173 = vmatprep.subr.bf16.mxu0 0
  %174 = vmatpush1.bf16.msra.mxu0 %v152
  %175 = vmatprep.subr.bf16.mxu0 0
  %176 = vmatpush1.bf16.msra.mxu0 %v153
  %177 = vmatprep.subr.bf16.mxu0 0
  %178 = vmatpush1.bf16.msra.mxu0 %v154
  %179 = vmatprep.subr.bf16.mxu0 0
  %180 = vmatpush1.bf16.msra.mxu0 0
  %181 = vmatprep.subr.bf16.mxu0 0
  %182 = vmatpush1.bf16.msra.mxu0 0
  %183 = vmatprep.subr.bf16.mxu0 0
  %184 = vmatpush1.bf16.msra.mxu0 0
  %185 = vmatprep.subr.bf16.mxu0 0
  %186 = vmatpush1.bf16.msra.mxu0 0
  %187 = vmatprep.subr.bf16.mxu0 0
  %188 = vmatpush1.bf16.msra.mxu0 0
  %189 = vmatprep.subr.bf16.mxu0 0
  %190 = vmatpush1.bf16.msra.mxu0 0
  %191 = vmatprep.subr.bf16.mxu0 0
  %192 = vmatpush1.bf16.msra.mxu0 0
  %193 = vmatprep.subr.bf16.mxu0 0
  %194 = vmatpush1.bf16.msra.mxu0 0
  %195 = vmatprep.mubr.bf16.mxu0 0
  %196 = vmatmul.mubr.bf16.gmra.mrb[0].mxu0 %v96
  %v197 = vpop.f32.mrb[0].mxu0
  %v198 = vadd.f32 0.0, %v197
  %v199 = vpop.f32.mrb[0].mxu0
  %v200 = vpop.f32.mrb[0].mxu0
  %v201 = vadd.f32 0.0, %v200
  %v202 = vpop.f32.mrb[0].mxu0
  %203 = vmatprep.mubr.bf16.mxu0 0
  %204 = vmatmul.mubr.bf16.gmra.mrb[0].mxu0 %v97
  %v205 = vpop.f32.mrb[0].mxu0
  %v206 = vadd.f32 0.0, %v205
  %v207 = vpop.f32.mrb[0].mxu0
  %v208 = vpop.f32.mrb[0].mxu0
  %v209 = vadd.f32 0.0, %v208
  %v210 = vpop.f32.mrb[0].mxu0
  %211 = vdwg.mxu0
  %v228 = vunpack.c.l.b16 %v61
  %v229 = vunpack.c.l.b16 %v62
  %v230 = vunpack.c.l.b16 %v63
  %v231 = vunpack.c.l.b16 %v64
  %v232 = vunpack.c.l.b16 %v65
  %v233 = vunpack.c.l.b16 %v66
  %v234 = vunpack.c.l.b16 %v67
  %v235 = vunpack.c.l.b16 %v68
  %v236 = vunpack.c.l.b16 %v69
  %v237 = vunpack.c.l.b16 %v70
  %v238 = vunpack.c.l.b16 %v71
  %v239 = vunpack.c.l.b16 %v72
  %v240 = vunpack.c.l.b16 %v73
  %v241 = vunpack.c.l.b16 %v74
  %v242 = vunpack.c.l.b16 %v75
  %v243 = vunpack.c.l.b16 %v76
  %v244 = vpack.c.b16 %v229, %v228
  %v245 = vpack.c.b16 %v231, %v230
  %v246 = vpack.c.b16 %v233, %v232
  %v247 = vpack.c.b16 %v235, %v234
  %v248 = vpack.c.b16 %v237, %v236
  %v249 = vpack.c.b16 %v239, %v238
  %v250 = vpack.c.b16 %v241, %v240
  %v251 = vpack.c.b16 %v243, %v242
  %260 = vmatprep.subr.bf16.mxu0 0
  %261 = vmatpush1.bf16.msra.mxu0 %v244
  %262 = vmatprep.subr.bf16.mxu0 0
  %263 = vmatpush1.bf16.msra.mxu0 %v245
  %264 = vmatprep.subr.bf16.mxu0 0
  %265 = vmatpush1.bf16.msra.mxu0 %v246
  %266 = vmatprep.subr.bf16.mxu0 0
  %267 = vmatpush1.bf16.msra.mxu0 %v247
  %268 = vmatprep.subr.bf16.mxu0 0
  %269 = vmatpush1.bf16.msra.mxu0 %v248
  %270 = vmatprep.subr.bf16.mxu0 0
  %271 = vmatpush1.bf16.msra.mxu0 %v249
  %272 = vmatprep.subr.bf16.mxu0 0
  %273 = vmatpush1.bf16.msra.mxu0 %v250
  %274 = vmatprep.subr.bf16.mxu0 0
  %275 = vmatpush1.bf16.msra.mxu0 %v251
  %276 = vmatprep.subr.bf16.mxu0 0
  %277 = vmatpush1.bf16.msra.mxu0 0
  %278 = vmatprep.subr.bf16.mxu0 0
  %279 = vmatpush1.bf16.msra.mxu0 0
  %280 = vmatprep.subr.bf16.mxu0 0
  %281 = vmatpush1.bf16.msra.mxu0 0
  %282 = vmatprep.subr.bf16.mxu0 0
  %283 = vmatpush1.bf16.msra.mxu0 0
  %284 = vmatprep.subr.bf16.mxu0 0
  %285 = vmatpush1.bf16.msra.mxu0 0
  %286 = vmatprep.subr.bf16.mxu0 0
  %287 = vmatpush1.bf16.msra.mxu0 0
  %288 = vmatprep.subr.bf16.mxu0 0
  %289 = vmatpush1.bf16.msra.mxu0 0
  %290 = vmatprep.subr.bf16.mxu0 0
  %291 = vmatpush1.bf16.msra.mxu0 0
  %292 = vmatprep.mubr.bf16.mxu0 0
  %293 = vmatmul.mubr.bf16.gmra.mrb[0].mxu0 %v59
  %v294 = vpop.f32.mrb[0].mxu0
  %v295 = vadd.f32 %v198, %v294
  %v296 = vpop.f32.mrb[0].mxu0
  %v297 = vpop.f32.mrb[0].mxu0
  %v298 = vadd.f32 %v201, %v297
  %v299 = vpop.f32.mrb[0].mxu0
  %300 = vmatprep.mubr.bf16.mxu0 0
  %301 = vmatmul.mubr.bf16.gmra.mrb[0].mxu0 %v60
  %v302 = vpop.f32.mrb[0].mxu0
  %v303 = vadd.f32 %v206, %v302
  %v304 = vpop.f32.mrb[0].mxu0
  %v305 = vpop.f32.mrb[0].mxu0
  %v306 = vadd.f32 %v209, %v305
  %v307 = vpop.f32.mrb[0].mxu0
  %308 = vdwg.mxu0
  %vm309 = vcmask 1045504
  %v310 = vrot.slane %v55, 2
  %v311 = vrot.slane %v45, 2
  %v312 = vsel %vm309, %v310, %v311
  %v313 = vrot.slane %v57, 2
  %v314 = vsel %vm309, %v311, %v313
  %v315 = vrot.slane %v56, 2
  %v316 = vrot.slane %v48, 2
  %v317 = vsel %vm309, %v315, %v316
  %v318 = vrot.slane %v58, 2
  %v319 = vsel %vm309, %v316, %v318
  %v324 = vpack.c.bf16 %v314, %v312
  %v325 = vpack.c.bf16 %v319, %v317
  %s326 = scalar_lea.vmem %s1, 128
  %v327 = vld [vmem:[%s326] sm:$0xf]
  %v328 = vld [vmem:[%s326 + $0x4] sm:$0xf]
  %v329 = vld [vmem:[%s326 + $0x8] sm:$0xf]
  %v330 = vld [vmem:[%s326 + $0xc] sm:$0xf]
  %v331 = vld [vmem:[%s326 + $0x10] sm:$0xf]
  %v332 = vld [vmem:[%s326 + $0x14] sm:$0xf]
  %v333 = vld [vmem:[%s326 + $0x18] sm:$0xf]
  %v334 = vld [vmem:[%s326 + $0x1c] sm:$0xf]
  %v335 = vld [vmem:[%s326 + $0x20] sm:$0xf]
  %v336 = vld [vmem:[%s326 + $0x24] sm:$0xf]
  %v337 = vld [vmem:[%s326 + $0x28] sm:$0xf]
  %v338 = vld [vmem:[%s326 + $0x2c] sm:$0xf]
  %v339 = vld [vmem:[%s326 + $0x30] sm:$0xf]
  %v340 = vld [vmem:[%s326 + $0x34] sm:$0xf]
  %v341 = vld [vmem:[%s326 + $0x38] sm:$0xf]
  %v342 = vld [vmem:[%s326 + $0x3c] sm:$0xf]
  %v359 = vunpack.c.l.b16 %v327
  %v360 = vunpack.c.l.b16 %v328
  %v361 = vunpack.c.l.b16 %v329
  %v362 = vunpack.c.l.b16 %v330
  %v363 = vunpack.c.l.b16 %v331
  %v364 = vunpack.c.l.b16 %v332
  %v365 = vunpack.c.l.b16 %v333
  %v366 = vunpack.c.l.b16 %v334
  %v367 = vunpack.c.l.b16 %v335
  %v368 = vunpack.c.l.b16 %v336
  %v369 = vunpack.c.l.b16 %v337
  %v370 = vunpack.c.l.b16 %v338
  %v371 = vunpack.c.l.b16 %v339
  %v372 = vunpack.c.l.b16 %v340
  %v373 = vunpack.c.l.b16 %v341
  %v374 = vunpack.c.l.b16 %v342
  %v375 = vpack.c.b16 %v360, %v359
  %v376 = vpack.c.b16 %v362, %v361
  %v377 = vpack.c.b16 %v364, %v363
  %v378 = vpack.c.b16 %v366, %v365
  %v379 = vpack.c.b16 %v368, %v367
  %v380 = vpack.c.b16 %v370, %v369
  %v381 = vpack.c.b16 %v372, %v371
  %v382 = vpack.c.b16 %v374, %v373
  %391 = vmatprep.subr.bf16.mxu0 0
  %392 = vmatpush1.bf16.msra.mxu0 %v375
  %393 = vmatprep.subr.bf16.mxu0 0
  %394 = vmatpush1.bf16.msra.mxu0 %v376
  %395 = vmatprep.subr.bf16.mxu0 0
  %396 = vmatpush1.bf16.msra.mxu0 %v377
  %397 = vmatprep.subr.bf16.mxu0 0
  %398 = vmatpush1.bf16.msra.mxu0 %v378
  %399 = vmatprep.subr.bf16.mxu0 0
  %400 = vmatpush1.bf16.msra.mxu0 %v379
  %401 = vmatprep.subr.bf16.mxu0 0
  %402 = vmatpush1.bf16.msra.mxu0 %v380
  %403 = vmatprep.subr.bf16.mxu0 0
  %404 = vmatpush1.bf16.msra.mxu0 %v381
  %405 = vmatprep.subr.bf16.mxu0 0
  %406 = vmatpush1.bf16.msra.mxu0 %v382
  %407 = vmatprep.subr.bf16.mxu0 0
  %408 = vmatpush1.bf16.msra.mxu0 0
  %409 = vmatprep.subr.bf16.mxu0 0
  %410 = vmatpush1.bf16.msra.mxu0 0
  %411 = vmatprep.subr.bf16.mxu0 0
  %412 = vmatpush1.bf16.msra.mxu0 0
  %413 = vmatprep.subr.bf16.mxu0 0
  %414 = vmatpush1.bf16.msra.mxu0 0
  %415 = vmatprep.subr.bf16.mxu0 0
  %416 = vmatpush1.bf16.msra.mxu0 0
  %417 = vmatprep.subr.bf16.mxu0 0
  %418 = vmatpush1.bf16.msra.mxu0 0
  %419 = vmatprep.subr.bf16.mxu0 0
  %420 = vmatpush1.bf16.msra.mxu0 0
  %421 = vmatprep.subr.bf16.mxu0 0
  %422 = vmatpush1.bf16.msra.mxu0 0
  %423 = vmatprep.mubr.bf16.mxu0 0
  %424 = vmatmul.mubr.bf16.gmra.mrb[0].mxu0 %v324
  %v425 = vpop.f32.mrb[0].mxu0
  %v426 = vadd.f32 0.0, %v425
  %v427 = vpop.f32.mrb[0].mxu0
  %v428 = vpop.f32.mrb[0].mxu0
  %v429 = vadd.f32 0.0, %v428
  %v430 = vpop.f32.mrb[0].mxu0
  %431 = vmatprep.mubr.bf16.mxu0 0
  %432 = vmatmul.mubr.bf16.gmra.mrb[0].mxu0 %v325
  %v433 = vpop.f32.mrb[0].mxu0
  %v434 = vadd.f32 0.0, %v433
  %v435 = vpop.f32.mrb[0].mxu0
  %v436 = vpop.f32.mrb[0].mxu0
  %v437 = vadd.f32 0.0, %v436
  %v438 = vpop.f32.mrb[0].mxu0
  %439 = vdwg.mxu0
  %v440 = vadd.f32 %v295, %v426
  %v441 = vadd.f32 %v298, %v429
  %v442 = vadd.f32 %v303, %v434
  %v443 = vadd.f32 %v306, %v437
  %v444 = vadd.f32 %v440, %v441
  %v445 = vadd.f32 %v444, %v442
  %v446 = vadd.f32 %v445, %v443
  %v447 = vrot.slane %v446, 4
  %v448 = vadd.f32 %v446, %v447
  %v449 = vrot.slane %v448, 2
  %v450 = vadd.f32 %v448, %v449
  %v451 = vrot.slane %v450, 1
  %v452 = vadd.f32 %v450, %v451
  %v453 = vld [vmem:[%s3] sm:$0xff]
  %v454 = vld [vmem:[%s3 + $0x8] sm:$0xff]
  %v455 = vld [vmem:[%s3 + $0x10] sm:$0xff]
  %v456 = vld [vmem:[%s3 + $0x18] sm:$0xff]
  %v457 = vld [vmem:[%s3 + $0x20] sm:$0xff]
  %v458 = vld [vmem:[%s3 + $0x28] sm:$0xff]
  %v459 = vld [vmem:[%s3 + $0x30] sm:$0xff]
  %v460 = vld [vmem:[%s3 + $0x38] sm:$0xff]
  %v461 = vld [vmem:[%s3 + $0x40] sm:$0xff]
  %v462 = vld [vmem:[%s3 + $0x48] sm:$0xff]
  %v463 = vld [vmem:[%s3 + $0x50] sm:$0xff]
  %v464 = vld [vmem:[%s3 + $0x58] sm:$0xff]
  %v465 = vld [vmem:[%s3 + $0x60] sm:$0xff]
  %v466 = vld [vmem:[%s3 + $0x68] sm:$0xff]
  %v467 = vld [vmem:[%s3 + $0x70] sm:$0xff]
  %v468 = vld [vmem:[%s3 + $0x78] sm:$0xff]
  %469 = vmatprep.subr.mxu0 0.0
  %470 = vmatpush1.msra.mxu0 %v453
  %471 = vmatprep.subr.mxu0 0.0
  %472 = vmatpush1.msra.mxu0 %v454
  %473 = vmatprep.subr.mxu0 0.0
  %474 = vmatpush1.msra.mxu0 %v455
  %475 = vmatprep.subr.mxu0 0.0
  %476 = vmatpush1.msra.mxu0 %v456
  %477 = vmatprep.subr.mxu0 0.0
  %478 = vmatpush1.msra.mxu0 %v457
  %479 = vmatprep.subr.mxu0 0.0
  %480 = vmatpush1.msra.mxu0 %v458
  %481 = vmatprep.subr.mxu0 0.0
  %482 = vmatpush1.msra.mxu0 %v459
  %483 = vmatprep.subr.mxu0 0.0
  %484 = vmatpush1.msra.mxu0 %v460
  %485 = vmatprep.subr.mxu0 0.0
  %486 = vmatpush1.msra.mxu0 %v461
  %487 = vmatprep.subr.mxu0 0.0
  %488 = vmatpush1.msra.mxu0 %v462
  %489 = vmatprep.subr.mxu0 0.0
  %490 = vmatpush1.msra.mxu0 %v463
  %491 = vmatprep.subr.mxu0 0.0
  %492 = vmatpush1.msra.mxu0 %v464
  %493 = vmatprep.subr.mxu0 0.0
  %494 = vmatpush1.msra.mxu0 %v465
  %495 = vmatprep.subr.mxu0 0.0
  %496 = vmatpush1.msra.mxu0 %v466
  %497 = vmatprep.subr.mxu0 0.0
  %498 = vmatpush1.msra.mxu0 %v467
  %499 = vmatprep.subr.mxu0 0.0
  %500 = vmatpush1.msra.mxu0 %v468
  %501 = vmatprep.subr.mxu0 0.0
  %502 = vmatpush1.msra.mxu0 0.0
  %503 = vmatprep.subr.mxu0 0.0
  %504 = vmatpush1.msra.mxu0 0.0
  %505 = vmatprep.subr.mxu0 0.0
  %506 = vmatpush1.msra.mxu0 0.0
  %507 = vmatprep.subr.mxu0 0.0
  %508 = vmatpush1.msra.mxu0 0.0
  %509 = vmatprep.subr.mxu0 0.0
  %510 = vmatpush1.msra.mxu0 0.0
  %511 = vmatprep.subr.mxu0 0.0
  %512 = vmatpush1.msra.mxu0 0.0
  %513 = vmatprep.subr.mxu0 0.0
  %514 = vmatpush1.msra.mxu0 0.0
  %515 = vmatprep.subr.mxu0 0.0
  %516 = vmatpush1.msra.mxu0 0.0
  %517 = vmatprep.subr.mxu0 0.0
  %518 = vmatpush1.msra.mxu0 0.0
  %519 = vmatprep.subr.mxu0 0.0
  %520 = vmatpush1.msra.mxu0 0.0
  %521 = vmatprep.subr.mxu0 0.0
  %522 = vmatpush1.msra.mxu0 0.0
  %523 = vmatprep.subr.mxu0 0.0
  %524 = vmatpush1.msra.mxu0 0.0
  %525 = vmatprep.subr.mxu0 0.0
  %526 = vmatpush1.msra.mxu0 0.0
  %527 = vmatprep.subr.mxu0 0.0
  %528 = vmatpush1.msra.mxu0 0.0
  %529 = vmatprep.subr.mxu0 0.0
  %530 = vmatpush1.msra.mxu0 0.0
  %531 = vmatprep.subr.mxu0 0.0
  %532 = vmatpush1.msra.mxu0 0.0
  %533 = vmatprep.mubr.f32.mxu0 0.0
  %534 = vmatmul.mubr.f32.gmra.mrb[0].mxu0 %v452
  %v535 = vpop.f32.mrb[0].mxu0
  %v536 = vadd.f32 0.0, %v535
  %v537 = vpop.f32.mrb[0].mxu0
  %538 = vdwg.mxu0
  %v539 = vmul.f32 %v536, 0.001953125
  %v540 = vlaneseq
  %v541 = vshrl.u32 %v540, 7
  %v542 = vsub.s32 0, %v541
  %v543 = vrot.slane %v539, %v542
  %v544 = vsub.f32 %v440, %v543
  %v545 = vsub.f32 %v441, %v543
  %v546 = vsub.f32 %v442, %v543
  %v547 = vsub.f32 %v443, %v543
  %v548 = vmul.f32 %v544, %v544
  %v549 = vmul.f32 %v545, %v545
  %v550 = vmul.f32 %v546, %v546
  %v551 = vmul.f32 %v547, %v547
  %v552 = vadd.f32 %v548, %v549
  %v553 = vadd.f32 %v552, %v550
  %v554 = vadd.f32 %v553, %v551
  %v555 = vrot.slane %v554, 4
  %v556 = vadd.f32 %v554, %v555
  %v557 = vrot.slane %v556, 2
  %v558 = vadd.f32 %v556, %v557
  %v559 = vrot.slane %v558, 1
  %v560 = vadd.f32 %v558, %v559
  %561 = vmatprep.subr.mxu0 0.0
  %562 = vmatpush1.msra.mxu0 %v453
  %563 = vmatprep.subr.mxu0 0.0
  %564 = vmatpush1.msra.mxu0 %v454
  %565 = vmatprep.subr.mxu0 0.0
  %566 = vmatpush1.msra.mxu0 %v455
  %567 = vmatprep.subr.mxu0 0.0
  %568 = vmatpush1.msra.mxu0 %v456
  %569 = vmatprep.subr.mxu0 0.0
  %570 = vmatpush1.msra.mxu0 %v457
  %571 = vmatprep.subr.mxu0 0.0
  %572 = vmatpush1.msra.mxu0 %v458
  %573 = vmatprep.subr.mxu0 0.0
  %574 = vmatpush1.msra.mxu0 %v459
  %575 = vmatprep.subr.mxu0 0.0
  %576 = vmatpush1.msra.mxu0 %v460
  %577 = vmatprep.subr.mxu0 0.0
  %578 = vmatpush1.msra.mxu0 %v461
  %579 = vmatprep.subr.mxu0 0.0
  %580 = vmatpush1.msra.mxu0 %v462
  %581 = vmatprep.subr.mxu0 0.0
  %582 = vmatpush1.msra.mxu0 %v463
  %583 = vmatprep.subr.mxu0 0.0
  %584 = vmatpush1.msra.mxu0 %v464
  %585 = vmatprep.subr.mxu0 0.0
  %586 = vmatpush1.msra.mxu0 %v465
  %587 = vmatprep.subr.mxu0 0.0
  %588 = vmatpush1.msra.mxu0 %v466
  %589 = vmatprep.subr.mxu0 0.0
  %590 = vmatpush1.msra.mxu0 %v467
  %591 = vmatprep.subr.mxu0 0.0
  %592 = vmatpush1.msra.mxu0 %v468
  %593 = vmatprep.subr.mxu0 0.0
  %594 = vmatpush1.msra.mxu0 0.0
  %595 = vmatprep.subr.mxu0 0.0
  %596 = vmatpush1.msra.mxu0 0.0
  %597 = vmatprep.subr.mxu0 0.0
  %598 = vmatpush1.msra.mxu0 0.0
  %599 = vmatprep.subr.mxu0 0.0
  %600 = vmatpush1.msra.mxu0 0.0
  %601 = vmatprep.subr.mxu0 0.0
  %602 = vmatpush1.msra.mxu0 0.0
  %603 = vmatprep.subr.mxu0 0.0
  %604 = vmatpush1.msra.mxu0 0.0
  %605 = vmatprep.subr.mxu0 0.0
  %606 = vmatpush1.msra.mxu0 0.0
  %607 = vmatprep.subr.mxu0 0.0
  %608 = vmatpush1.msra.mxu0 0.0
  %609 = vmatprep.subr.mxu0 0.0
  %610 = vmatpush1.msra.mxu0 0.0
  %611 = vmatprep.subr.mxu0 0.0
  %612 = vmatpush1.msra.mxu0 0.0
  %613 = vmatprep.subr.mxu0 0.0
  %614 = vmatpush1.msra.mxu0 0.0
  %615 = vmatprep.subr.mxu0 0.0
  %616 = vmatpush1.msra.mxu0 0.0
  %617 = vmatprep.subr.mxu0 0.0
  %618 = vmatpush1.msra.mxu0 0.0
  %619 = vmatprep.subr.mxu0 0.0
  %620 = vmatpush1.msra.mxu0 0.0
  %621 = vmatprep.subr.mxu0 0.0
  %622 = vmatpush1.msra.mxu0 0.0
  %623 = vmatprep.subr.mxu0 0.0
  %624 = vmatpush1.msra.mxu0 0.0
  %625 = vmatprep.mubr.f32.mxu0 0.0
  %626 = vmatmul.mubr.f32.gmra.mrb[0].mxu0 %v560
  %v627 = vpop.f32.mrb[0].mxu0
  %v628 = vadd.f32 0.0, %v627
  %v629 = vpop.f32.mrb[0].mxu0
  %630 = vdwg.mxu0
  %v631 = vmul.f32 %v628, 0.001953125
  %v632 = vadd.f32 %v631, 1e-05
  %v633 = vrsqrt.pop %v632
  %v634 = vlaneseq
  %v635 = vshrl.u32 %v634, 7
  %v636 = vsub.s32 0, %v635
  %v637 = vrot.slane %v633, %v636
  %v638 = vmul.f32 %v544, %v637
  %v639 = vmul.f32 %v545, %v637
  %v640 = vmul.f32 %v546, %v637
  %v641 = vmul.f32 %v547, %v637
  %v642 = vld [vmem:[%s4] sm:$0x1]
  %v644 = vlaneseq
  %v645 = vshrl.u32 %v644, 7
  %v646 = vsub.s32 0, %v645
  %v647 = vrot.slane %v642, %v646
  %v649 = vmul.f32 %v638, %v647
  %v650 = vmul.f32 %v639, %v647
  %v651 = vmul.f32 %v640, %v647
  %v652 = vmul.f32 %v641, %v647
  %v653 = vld [vmem:[%s5] sm:$0x1]
  %v655 = vlaneseq
  %v656 = vshrl.u32 %v655, 7
  %v657 = vsub.s32 0, %v656
  %v658 = vrot.slane %v653, %v657
  %v660 = vadd.f32 %v649, %v658
  %v661 = vadd.f32 %v650, %v658
  %v662 = vadd.f32 %v651, %v658
  %v663 = vadd.f32 %v652, %v658
  %v664 = vmax.f32 %v660, 0.0
  %v665 = vmax.f32 %v661, 0.0
  %v666 = vmax.f32 %v662, 0.0
  %v667 = vmax.f32 %v663, 0.0
  %v672 = vrot.slane %v664, 7
  %v673 = vrot.slane %v665, 7
  %v674 = vsel %vm42, %v672, %v673
  %v675 = vrot.slane %v666, 7
  %v676 = vrot.slane %v667, 7
  %v677 = vsel %vm42, %v675, %v676
  %v684 = vsel %vm42, 0.0, %v672
  %v685 = vsel %vm42, 0.0, %v675
  %v686 = vsel %vm42, %v673, 0.0
  %v687 = vsel %vm42, %v676, 0.0
  %v688 = vpack.c.bf16 %v674, %v684
  %v689 = vpack.c.bf16 %v677, %v685
  %v690 = vld [vmem:[%s2] sm:$0xf]
  %v691 = vld [vmem:[%s2 + $0x4] sm:$0xf]
  %v692 = vld [vmem:[%s2 + $0x8] sm:$0xf]
  %v693 = vld [vmem:[%s2 + $0xc] sm:$0xf]
  %v694 = vld [vmem:[%s2 + $0x10] sm:$0xf]
  %v695 = vld [vmem:[%s2 + $0x14] sm:$0xf]
  %v696 = vld [vmem:[%s2 + $0x18] sm:$0xf]
  %v697 = vld [vmem:[%s2 + $0x1c] sm:$0xf]
  %v698 = vld [vmem:[%s2 + $0x20] sm:$0xf]
  %v699 = vld [vmem:[%s2 + $0x24] sm:$0xf]
  %v700 = vld [vmem:[%s2 + $0x28] sm:$0xf]
  %v701 = vld [vmem:[%s2 + $0x2c] sm:$0xf]
  %v702 = vld [vmem:[%s2 + $0x30] sm:$0xf]
  %v703 = vld [vmem:[%s2 + $0x34] sm:$0xf]
  %v704 = vld [vmem:[%s2 + $0x38] sm:$0xf]
  %v705 = vld [vmem:[%s2 + $0x3c] sm:$0xf]
  %v710 = vrot.slane %v684, 1
  %v711 = vrot.slane %v674, 1
  %v712 = vsel %vm81, %v710, %v711
  %v713 = vrot.slane %v686, 1
  %v714 = vsel %vm81, %v711, %v713
  %v715 = vrot.slane %v685, 1
  %v716 = vrot.slane %v677, 1
  %v717 = vsel %vm81, %v715, %v716
  %v718 = vrot.slane %v687, 1
  %v719 = vsel %vm81, %v716, %v718
  %v724 = vpack.c.bf16 %v714, %v712
  %v725 = vpack.c.bf16 %v719, %v717
  %s726 = scalar_lea.vmem %s2, 64
  %v727 = vld [vmem:[%s726] sm:$0xf]
  %v728 = vld [vmem:[%s726 + $0x4] sm:$0xf]
  %v729 = vld [vmem:[%s726 + $0x8] sm:$0xf]
  %v730 = vld [vmem:[%s726 + $0xc] sm:$0xf]
  %v731 = vld [vmem:[%s726 + $0x10] sm:$0xf]
  %v732 = vld [vmem:[%s726 + $0x14] sm:$0xf]
  %v733 = vld [vmem:[%s726 + $0x18] sm:$0xf]
  %v734 = vld [vmem:[%s726 + $0x1c] sm:$0xf]
  %v735 = vld [vmem:[%s726 + $0x20] sm:$0xf]
  %v736 = vld [vmem:[%s726 + $0x24] sm:$0xf]
  %v737 = vld [vmem:[%s726 + $0x28] sm:$0xf]
  %v738 = vld [vmem:[%s726 + $0x2c] sm:$0xf]
  %v739 = vld [vmem:[%s726 + $0x30] sm:$0xf]
  %v740 = vld [vmem:[%s726 + $0x34] sm:$0xf]
  %v741 = vld [vmem:[%s726 + $0x38] sm:$0xf]
  %v742 = vld [vmem:[%s726 + $0x3c] sm:$0xf]
  %v759 = vunpack.c.l.b16 %v727
  %v760 = vunpack.c.l.b16 %v728
  %v761 = vunpack.c.l.b16 %v729
  %v762 = vunpack.c.l.b16 %v730
  %v763 = vunpack.c.l.b16 %v731
  %v764 = vunpack.c.l.b16 %v732
  %v765 = vunpack.c.l.b16 %v733
  %v766 = vunpack.c.l.b16 %v734
  %v767 = vunpack.c.l.b16 %v735
  %v768 = vunpack.c.l.b16 %v736
  %v769 = vunpack.c.l.b16 %v737
  %v770 = vunpack.c.l.b16 %v738
  %v771 = vunpack.c.l.b16 %v739
  %v772 = vunpack.c.l.b16 %v740
  %v773 = vunpack.c.l.b16 %v741
  %v774 = vunpack.c.l.b16 %v742
  %v775 = vpack.c.b16 %v760, %v759
  %v776 = vpack.c.b16 %v762, %v761
  %v777 = vpack.c.b16 %v764, %v763
  %v778 = vpack.c.b16 %v766, %v765
  %v779 = vpack.c.b16 %v768, %v767
  %v780 = vpack.c.b16 %v770, %v769
  %v781 = vpack.c.b16 %v772, %v771
  %v782 = vpack.c.b16 %v774, %v773
  %791 = vmatprep.subr.bf16.mxu0 0
  %792 = vmatpush1.bf16.msra.mxu0 %v775
  %793 = vmatprep.subr.bf16.mxu0 0
  %794 = vmatpush1.bf16.msra.mxu0 %v776
  %795 = vmatprep.subr.bf16.mxu0 0
  %796 = vmatpush1.bf16.msra.mxu0 %v777
  %797 = vmatprep.subr.bf16.mxu0 0
  %798 = vmatpush1.bf16.msra.mxu0 %v778
  %799 = vmatprep.subr.bf16.mxu0 0
  %800 = vmatpush1.bf16.msra.mxu0 %v779
  %801 = vmatprep.subr.bf16.mxu0 0
  %802 = vmatpush1.bf16.msra.mxu0 %v780
  %803 = vmatprep.subr.bf16.mxu0 0
  %804 = vmatpush1.bf16.msra.mxu0 %v781
  %805 = vmatprep.subr.bf16.mxu0 0
  %806 = vmatpush1.bf16.msra.mxu0 %v782
  %807 = vmatprep.subr.bf16.mxu0 0
  %808 = vmatpush1.bf16.msra.mxu0 0
  %809 = vmatprep.subr.bf16.mxu0 0
  %810 = vmatpush1.bf16.msra.mxu0 0
  %811 = vmatprep.subr.bf16.mxu0 0
  %812 = vmatpush1.bf16.msra.mxu0 0
  %813 = vmatprep.subr.bf16.mxu0 0
  %814 = vmatpush1.bf16.msra.mxu0 0
  %815 = vmatprep.subr.bf16.mxu0 0
  %816 = vmatpush1.bf16.msra.mxu0 0
  %817 = vmatprep.subr.bf16.mxu0 0
  %818 = vmatpush1.bf16.msra.mxu0 0
  %819 = vmatprep.subr.bf16.mxu0 0
  %820 = vmatpush1.bf16.msra.mxu0 0
  %821 = vmatprep.subr.bf16.mxu0 0
  %822 = vmatpush1.bf16.msra.mxu0 0
  %823 = vmatprep.mubr.bf16.mxu0 0
  %824 = vmatmul.mubr.bf16.gmra.mrb[0].mxu0 %v724
  %v825 = vpop.f32.mrb[0].mxu0
  %v826 = vadd.f32 0.0, %v825
  %v827 = vpop.f32.mrb[0].mxu0
  %v828 = vpop.f32.mrb[0].mxu0
  %v829 = vadd.f32 0.0, %v828
  %v830 = vpop.f32.mrb[0].mxu0
  %831 = vmatprep.mubr.bf16.mxu0 0
  %832 = vmatmul.mubr.bf16.gmra.mrb[0].mxu0 %v725
  %v833 = vpop.f32.mrb[0].mxu0
  %v834 = vadd.f32 0.0, %v833
  %v835 = vpop.f32.mrb[0].mxu0
  %v836 = vpop.f32.mrb[0].mxu0
  %v837 = vadd.f32 0.0, %v836
  %v838 = vpop.f32.mrb[0].mxu0
  %839 = vdwg.mxu0
  %v856 = vunpack.c.l.b16 %v690
  %v857 = vunpack.c.l.b16 %v691
  %v858 = vunpack.c.l.b16 %v692
  %v859 = vunpack.c.l.b16 %v693
  %v860 = vunpack.c.l.b16 %v694
  %v861 = vunpack.c.l.b16 %v695
  %v862 = vunpack.c.l.b16 %v696
  %v863 = vunpack.c.l.b16 %v697
  %v864 = vunpack.c.l.b16 %v698
  %v865 = vunpack.c.l.b16 %v699
  %v866 = vunpack.c.l.b16 %v700
  %v867 = vunpack.c.l.b16 %v701
  %v868 = vunpack.c.l.b16 %v702
  %v869 = vunpack.c.l.b16 %v703
  %v870 = vunpack.c.l.b16 %v704
  %v871 = vunpack.c.l.b16 %v705
  %v872 = vpack.c.b16 %v857, %v856
  %v873 = vpack.c.b16 %v859, %v858
  %v874 = vpack.c.b16 %v861, %v860
  %v875 = vpack.c.b16 %v863, %v862
  %v876 = vpack.c.b16 %v865, %v864
  %v877 = vpack.c.b16 %v867, %v866
  %v878 = vpack.c.b16 %v869, %v868
  %v879 = vpack.c.b16 %v871, %v870
  %888 = vmatprep.subr.bf16.mxu0 0
  %889 = vmatpush1.bf16.msra.mxu0 %v872
  %890 = vmatprep.subr.bf16.mxu0 0
  %891 = vmatpush1.bf16.msra.mxu0 %v873
  %892 = vmatprep.subr.bf16.mxu0 0
  %893 = vmatpush1.bf16.msra.mxu0 %v874
  %894 = vmatprep.subr.bf16.mxu0 0
  %895 = vmatpush1.bf16.msra.mxu0 %v875
  %896 = vmatprep.subr.bf16.mxu0 0
  %897 = vmatpush1.bf16.msra.mxu0 %v876
  %898 = vmatprep.subr.bf16.mxu0 0
  %899 = vmatpush1.bf16.msra.mxu0 %v877
  %900 = vmatprep.subr.bf16.mxu0 0
  %901 = vmatpush1.bf16.msra.mxu0 %v878
  %902 = vmatprep.subr.bf16.mxu0 0
  %903 = vmatpush1.bf16.msra.mxu0 %v879
  %904 = vmatprep.subr.bf16.mxu0 0
  %905 = vmatpush1.bf16.msra.mxu0 0
  %906 = vmatprep.subr.bf16.mxu0 0
  %907 = vmatpush1.bf16.msra.mxu0 0
  %908 = vmatprep.subr.bf16.mxu0 0
  %909 = vmatpush1.bf16.msra.mxu0 0
  %910 = vmatprep.subr.bf16.mxu0 0
  %911 = vmatpush1.bf16.msra.mxu0 0
  %912 = vmatprep.subr.bf16.mxu0 0
  %913 = vmatpush1.bf16.msra.mxu0 0
  %914 = vmatprep.subr.bf16.mxu0 0
  %915 = vmatpush1.bf16.msra.mxu0 0
  %916 = vmatprep.subr.bf16.mxu0 0
  %917 = vmatpush1.bf16.msra.mxu0 0
  %918 = vmatprep.subr.bf16.mxu0 0
  %919 = vmatpush1.bf16.msra.mxu0 0
  %920 = vmatprep.mubr.bf16.mxu0 0
  %921 = vmatmul.mubr.bf16.gmra.mrb[0].mxu0 %v688
  %v922 = vpop.f32.mrb[0].mxu0
  %v923 = vadd.f32 %v826, %v922
  %v924 = vpop.f32.mrb[0].mxu0
  %v925 = vpop.f32.mrb[0].mxu0
  %v926 = vadd.f32 %v829, %v925
  %v927 = vpop.f32.mrb[0].mxu0
  %928 = vmatprep.mubr.bf16.mxu0 0
  %929 = vmatmul.mubr.bf16.gmra.mrb[0].mxu0 %v689
  %v930 = vpop.f32.mrb[0].mxu0
  %v931 = vadd.f32 %v834, %v930
  %v932 = vpop.f32.mrb[0].mxu0
  %v933 = vpop.f32.mrb[0].mxu0
  %v934 = vadd.f32 %v837, %v933
  %v935 = vpop.f32.mrb[0].mxu0
  %936 = vdwg.mxu0
  %v937 = vrot.slane %v684, 2
  %v938 = vrot.slane %v674, 2
  %v939 = vsel %vm309, %v937, %v938
  %v940 = vrot.slane %v686, 2
  %v941 = vsel %vm309, %v938, %v940
  %v942 = vrot.slane %v685, 2
  %v943 = vrot.slane %v677, 2
  %v944 = vsel %vm309, %v942, %v943
  %v945 = vrot.slane %v687, 2
  %v946 = vsel %vm309, %v943, %v945
  %v951 = vpack.c.bf16 %v941, %v939
  %v952 = vpack.c.bf16 %v946, %v944
  %s953 = scalar_lea.vmem %s2, 128
  %v954 = vld [vmem:[%s953] sm:$0xf]
  %v955 = vld [vmem:[%s953 + $0x4] sm:$0xf]
  %v956 = vld [vmem:[%s953 + $0x8] sm:$0xf]
  %v957 = vld [vmem:[%s953 + $0xc] sm:$0xf]
  %v958 = vld [vmem:[%s953 + $0x10] sm:$0xf]
  %v959 = vld [vmem:[%s953 + $0x14] sm:$0xf]
  %v960 = vld [vmem:[%s953 + $0x18] sm:$0xf]
  %v961 = vld [vmem:[%s953 + $0x1c] sm:$0xf]
  %v962 = vld [vmem:[%s953 + $0x20] sm:$0xf]
  %v963 = vld [vmem:[%s953 + $0x24] sm:$0xf]
  %v964 = vld [vmem:[%s953 + $0x28] sm:$0xf]
  %v965 = vld [vmem:[%s953 + $0x2c] sm:$0xf]
  %v966 = vld [vmem:[%s953 + $0x30] sm:$0xf]
  %v967 = vld [vmem:[%s953 + $0x34] sm:$0xf]
  %v968 = vld [vmem:[%s953 + $0x38] sm:$0xf]
  %v969 = vld [vmem:[%s953 + $0x3c] sm:$0xf]
  %v986 = vunpack.c.l.b16 %v954
  %v987 = vunpack.c.l.b16 %v955
  %v988 = vunpack.c.l.b16 %v956
  %v989 = vunpack.c.l.b16 %v957
  %v990 = vunpack.c.l.b16 %v958
  %v991 = vunpack.c.l.b16 %v959
  %v992 = vunpack.c.l.b16 %v960
  %v993 = vunpack.c.l.b16 %v961
  %v994 = vunpack.c.l.b16 %v962
  %v995 = vunpack.c.l.b16 %v963
  %v996 = vunpack.c.l.b16 %v964
  %v997 = vunpack.c.l.b16 %v965
  %v998 = vunpack.c.l.b16 %v966
  %v999 = vunpack.c.l.b16 %v967
  %v1000 = vunpack.c.l.b16 %v968
  %v1001 = vunpack.c.l.b16 %v969
  %v1002 = vpack.c.b16 %v987, %v986
  %v1003 = vpack.c.b16 %v989, %v988
  %v1004 = vpack.c.b16 %v991, %v990
  %v1005 = vpack.c.b16 %v993, %v992
  %v1006 = vpack.c.b16 %v995, %v994
  %v1007 = vpack.c.b16 %v997, %v996
  %v1008 = vpack.c.b16 %v999, %v998
  %v1009 = vpack.c.b16 %v1001, %v1000
  %1018 = vmatprep.subr.bf16.mxu0 0
  %1019 = vmatpush1.bf16.msra.mxu0 %v1002
  %1020 = vmatprep.subr.bf16.mxu0 0
  %1021 = vmatpush1.bf16.msra.mxu0 %v1003
  %1022 = vmatprep.subr.bf16.mxu0 0
  %1023 = vmatpush1.bf16.msra.mxu0 %v1004
  %1024 = vmatprep.subr.bf16.mxu0 0
  %1025 = vmatpush1.bf16.msra.mxu0 %v1005
  %1026 = vmatprep.subr.bf16.mxu0 0
  %1027 = vmatpush1.bf16.msra.mxu0 %v1006
  %1028 = vmatprep.subr.bf16.mxu0 0
  %1029 = vmatpush1.bf16.msra.mxu0 %v1007
  %1030 = vmatprep.subr.bf16.mxu0 0
  %1031 = vmatpush1.bf16.msra.mxu0 %v1008
  %1032 = vmatprep.subr.bf16.mxu0 0
  %1033 = vmatpush1.bf16.msra.mxu0 %v1009
  %1034 = vmatprep.subr.bf16.mxu0 0
  %1035 = vmatpush1.bf16.msra.mxu0 0
  %1036 = vmatprep.subr.bf16.mxu0 0
  %1037 = vmatpush1.bf16.msra.mxu0 0
  %1038 = vmatprep.subr.bf16.mxu0 0
  %1039 = vmatpush1.bf16.msra.mxu0 0
  %1040 = vmatprep.subr.bf16.mxu0 0
  %1041 = vmatpush1.bf16.msra.mxu0 0
  %1042 = vmatprep.subr.bf16.mxu0 0
  %1043 = vmatpush1.bf16.msra.mxu0 0
  %1044 = vmatprep.subr.bf16.mxu0 0
  %1045 = vmatpush1.bf16.msra.mxu0 0
  %1046 = vmatprep.subr.bf16.mxu0 0
  %1047 = vmatpush1.bf16.msra.mxu0 0
  %1048 = vmatprep.subr.bf16.mxu0 0
  %1049 = vmatpush1.bf16.msra.mxu0 0
  %1050 = vmatprep.mubr.bf16.mxu0 0
  %1051 = vmatmul.mubr.bf16.gmra.mrb[0].mxu0 %v951
  %v1052 = vpop.f32.mrb[0].mxu0
  %v1053 = vadd.f32 0.0, %v1052
  %v1054 = vpop.f32.mrb[0].mxu0
  %v1055 = vpop.f32.mrb[0].mxu0
  %v1056 = vadd.f32 0.0, %v1055
  %v1057 = vpop.f32.mrb[0].mxu0
  %1058 = vmatprep.mubr.bf16.mxu0 0
  %1059 = vmatmul.mubr.bf16.gmra.mrb[0].mxu0 %v952
  %v1060 = vpop.f32.mrb[0].mxu0
  %v1061 = vadd.f32 0.0, %v1060
  %v1062 = vpop.f32.mrb[0].mxu0
  %v1063 = vpop.f32.mrb[0].mxu0
  %v1064 = vadd.f32 0.0, %v1063
  %v1065 = vpop.f32.mrb[0].mxu0
  %1066 = vdwg.mxu0
  %v1067 = vadd.f32 %v923, %v1053
  %v1068 = vadd.f32 %v926, %v1056
  %v1069 = vadd.f32 %v931, %v1061
  %v1070 = vadd.f32 %v934, %v1064
  %v1071 = vadd.f32 %v1067, %v1068
  %v1072 = vadd.f32 %v1071, %v1069
  %v1073 = vadd.f32 %v1072, %v1070
  %v1074 = vrot.slane %v1073, 4
  %v1075 = vadd.f32 %v1073, %v1074
  %v1076 = vrot.slane %v1075, 2
  %v1077 = vadd.f32 %v1075, %v1076
  %v1078 = vrot.slane %v1077, 1
  %v1079 = vadd.f32 %v1077, %v1078
  %1080 = vmatprep.subr.mxu0 0.0
  %1081 = vmatpush1.msra.mxu0 %v453
  %1082 = vmatprep.subr.mxu0 0.0
  %1083 = vmatpush1.msra.mxu0 %v454
  %1084 = vmatprep.subr.mxu0 0.0
  %1085 = vmatpush1.msra.mxu0 %v455
  %1086 = vmatprep.subr.mxu0 0.0
  %1087 = vmatpush1.msra.mxu0 %v456
  %1088 = vmatprep.subr.mxu0 0.0
  %1089 = vmatpush1.msra.mxu0 %v457
  %1090 = vmatprep.subr.mxu0 0.0
  %1091 = vmatpush1.msra.mxu0 %v458
  %1092 = vmatprep.subr.mxu0 0.0
  %1093 = vmatpush1.msra.mxu0 %v459
  %1094 = vmatprep.subr.mxu0 0.0
  %1095 = vmatpush1.msra.mxu0 %v460
  %1096 = vmatprep.subr.mxu0 0.0
  %1097 = vmatpush1.msra.mxu0 %v461
  %1098 = vmatprep.subr.mxu0 0.0
  %1099 = vmatpush1.msra.mxu0 %v462
  %1100 = vmatprep.subr.mxu0 0.0
  %1101 = vmatpush1.msra.mxu0 %v463
  %1102 = vmatprep.subr.mxu0 0.0
  %1103 = vmatpush1.msra.mxu0 %v464
  %1104 = vmatprep.subr.mxu0 0.0
  %1105 = vmatpush1.msra.mxu0 %v465
  %1106 = vmatprep.subr.mxu0 0.0
  %1107 = vmatpush1.msra.mxu0 %v466
  %1108 = vmatprep.subr.mxu0 0.0
  %1109 = vmatpush1.msra.mxu0 %v467
  %1110 = vmatprep.subr.mxu0 0.0
  %1111 = vmatpush1.msra.mxu0 %v468
  %1112 = vmatprep.subr.mxu0 0.0
  %1113 = vmatpush1.msra.mxu0 0.0
  %1114 = vmatprep.subr.mxu0 0.0
  %1115 = vmatpush1.msra.mxu0 0.0
  %1116 = vmatprep.subr.mxu0 0.0
  %1117 = vmatpush1.msra.mxu0 0.0
  %1118 = vmatprep.subr.mxu0 0.0
  %1119 = vmatpush1.msra.mxu0 0.0
  %1120 = vmatprep.subr.mxu0 0.0
  %1121 = vmatpush1.msra.mxu0 0.0
  %1122 = vmatprep.subr.mxu0 0.0
  %1123 = vmatpush1.msra.mxu0 0.0
  %1124 = vmatprep.subr.mxu0 0.0
  %1125 = vmatpush1.msra.mxu0 0.0
  %1126 = vmatprep.subr.mxu0 0.0
  %1127 = vmatpush1.msra.mxu0 0.0
  %1128 = vmatprep.subr.mxu0 0.0
  %1129 = vmatpush1.msra.mxu0 0.0
  %1130 = vmatprep.subr.mxu0 0.0
  %1131 = vmatpush1.msra.mxu0 0.0
  %1132 = vmatprep.subr.mxu0 0.0
  %1133 = vmatpush1.msra.mxu0 0.0
  %1134 = vmatprep.subr.mxu0 0.0
  %1135 = vmatpush1.msra.mxu0 0.0
  %1136 = vmatprep.subr.mxu0 0.0
  %1137 = vmatpush1.msra.mxu0 0.0
  %1138 = vmatprep.subr.mxu0 0.0
  %1139 = vmatpush1.msra.mxu0 0.0
  %1140 = vmatprep.subr.mxu0 0.0
  %1141 = vmatpush1.msra.mxu0 0.0
  %1142 = vmatprep.subr.mxu0 0.0
  %1143 = vmatpush1.msra.mxu0 0.0
  %1144 = vmatprep.mubr.f32.mxu0 0.0
  %1145 = vmatmul.mubr.f32.gmra.mrb[0].mxu0 %v1079
  %v1146 = vpop.f32.mrb[0].mxu0
  %v1147 = vadd.f32 0.0, %v1146
  %v1148 = vpop.f32.mrb[0].mxu0
  %1149 = vdwg.mxu0
  %v1150 = vmul.f32 %v1147, 0.001953125
  %v1151 = vlaneseq
  %v1152 = vshrl.u32 %v1151, 7
  %v1153 = vsub.s32 0, %v1152
  %v1154 = vrot.slane %v1150, %v1153
  %v1155 = vsub.f32 %v1067, %v1154
  %v1156 = vsub.f32 %v1068, %v1154
  %v1157 = vsub.f32 %v1069, %v1154
  %v1158 = vsub.f32 %v1070, %v1154
  %v1159 = vmul.f32 %v1155, %v1155
  %v1160 = vmul.f32 %v1156, %v1156
  %v1161 = vmul.f32 %v1157, %v1157
  %v1162 = vmul.f32 %v1158, %v1158
  %v1163 = vadd.f32 %v1159, %v1160
  %v1164 = vadd.f32 %v1163, %v1161
  %v1165 = vadd.f32 %v1164, %v1162
  %v1166 = vrot.slane %v1165, 4
  %v1167 = vadd.f32 %v1165, %v1166
  %v1168 = vrot.slane %v1167, 2
  %v1169 = vadd.f32 %v1167, %v1168
  %v1170 = vrot.slane %v1169, 1
  %v1171 = vadd.f32 %v1169, %v1170
  %1172 = vmatprep.subr.mxu0 0.0
  %1173 = vmatpush1.msra.mxu0 %v453
  %1174 = vmatprep.subr.mxu0 0.0
  %1175 = vmatpush1.msra.mxu0 %v454
  %1176 = vmatprep.subr.mxu0 0.0
  %1177 = vmatpush1.msra.mxu0 %v455
  %1178 = vmatprep.subr.mxu0 0.0
  %1179 = vmatpush1.msra.mxu0 %v456
  %1180 = vmatprep.subr.mxu0 0.0
  %1181 = vmatpush1.msra.mxu0 %v457
  %1182 = vmatprep.subr.mxu0 0.0
  %1183 = vmatpush1.msra.mxu0 %v458
  %1184 = vmatprep.subr.mxu0 0.0
  %1185 = vmatpush1.msra.mxu0 %v459
  %1186 = vmatprep.subr.mxu0 0.0
  %1187 = vmatpush1.msra.mxu0 %v460
  %1188 = vmatprep.subr.mxu0 0.0
  %1189 = vmatpush1.msra.mxu0 %v461
  %1190 = vmatprep.subr.mxu0 0.0
  %1191 = vmatpush1.msra.mxu0 %v462
  %1192 = vmatprep.subr.mxu0 0.0
  %1193 = vmatpush1.msra.mxu0 %v463
  %1194 = vmatprep.subr.mxu0 0.0
  %1195 = vmatpush1.msra.mxu0 %v464
  %1196 = vmatprep.subr.mxu0 0.0
  %1197 = vmatpush1.msra.mxu0 %v465
  %1198 = vmatprep.subr.mxu0 0.0
  %1199 = vmatpush1.msra.mxu0 %v466
  %1200 = vmatprep.subr.mxu0 0.0
  %1201 = vmatpush1.msra.mxu0 %v467
  %1202 = vmatprep.subr.mxu0 0.0
  %1203 = vmatpush1.msra.mxu0 %v468
  %1204 = vmatprep.subr.mxu0 0.0
  %1205 = vmatpush1.msra.mxu0 0.0
  %1206 = vmatprep.subr.mxu0 0.0
  %1207 = vmatpush1.msra.mxu0 0.0
  %1208 = vmatprep.subr.mxu0 0.0
  %1209 = vmatpush1.msra.mxu0 0.0
  %1210 = vmatprep.subr.mxu0 0.0
  %1211 = vmatpush1.msra.mxu0 0.0
  %1212 = vmatprep.subr.mxu0 0.0
  %1213 = vmatpush1.msra.mxu0 0.0
  %1214 = vmatprep.subr.mxu0 0.0
  %1215 = vmatpush1.msra.mxu0 0.0
  %1216 = vmatprep.subr.mxu0 0.0
  %1217 = vmatpush1.msra.mxu0 0.0
  %1218 = vmatprep.subr.mxu0 0.0
  %1219 = vmatpush1.msra.mxu0 0.0
  %1220 = vmatprep.subr.mxu0 0.0
  %1221 = vmatpush1.msra.mxu0 0.0
  %1222 = vmatprep.subr.mxu0 0.0
  %1223 = vmatpush1.msra.mxu0 0.0
  %1224 = vmatprep.subr.mxu0 0.0
  %1225 = vmatpush1.msra.mxu0 0.0
  %1226 = vmatprep.subr.mxu0 0.0
  %1227 = vmatpush1.msra.mxu0 0.0
  %1228 = vmatprep.subr.mxu0 0.0
  %1229 = vmatpush1.msra.mxu0 0.0
  %1230 = vmatprep.subr.mxu0 0.0
  %1231 = vmatpush1.msra.mxu0 0.0
  %1232 = vmatprep.subr.mxu0 0.0
  %1233 = vmatpush1.msra.mxu0 0.0
  %1234 = vmatprep.subr.mxu0 0.0
  %1235 = vmatpush1.msra.mxu0 0.0
  %1236 = vmatprep.mubr.f32.mxu0 0.0
  %1237 = vmatmul.mubr.f32.gmra.mrb[0].mxu0 %v1171
  %v1238 = vpop.f32.mrb[0].mxu0
  %v1239 = vadd.f32 0.0, %v1238
  %v1240 = vpop.f32.mrb[0].mxu0
  %1241 = vdwg.mxu0
  %v1242 = vmul.f32 %v1239, 0.001953125
  %v1243 = vadd.f32 %v1242, 1e-05
  %v1244 = vrsqrt.pop %v1243
  %v1245 = vlaneseq
  %v1246 = vshrl.u32 %v1245, 7
  %v1247 = vsub.s32 0, %v1246
  %v1248 = vrot.slane %v1244, %v1247
  %v1249 = vmul.f32 %v1155, %v1248
  %v1250 = vmul.f32 %v1156, %v1248
  %v1251 = vmul.f32 %v1157, %v1248
  %v1252 = vmul.f32 %v1158, %v1248
  %v1253 = vld [vmem:[%s6] sm:$0x1]
  %v1255 = vlaneseq
  %v1256 = vshrl.u32 %v1255, 7
  %v1257 = vsub.s32 0, %v1256
  %v1258 = vrot.slane %v1253, %v1257
  %v1260 = vmul.f32 %v1249, %v1258
  %v1261 = vmul.f32 %v1250, %v1258
  %v1262 = vmul.f32 %v1251, %v1258
  %v1263 = vmul.f32 %v1252, %v1258
  %v1264 = vld [vmem:[%s7] sm:$0x1]
  %v1266 = vlaneseq
  %v1267 = vshrl.u32 %v1266, 7
  %v1268 = vsub.s32 0, %v1267
  %v1269 = vrot.slane %v1264, %v1268
  %v1271 = vadd.f32 %v1260, %v1269
  %v1272 = vadd.f32 %v1261, %v1269
  %v1273 = vadd.f32 %v1262, %v1269
  %v1274 = vadd.f32 %v1263, %v1269
  %v1275 = vmax.f32 %v1271, 0.0
  %v1276 = vmax.f32 %v1272, 0.0
  %v1277 = vmax.f32 %v1273, 0.0
  %v1278 = vmax.f32 %v1274, 0.0
  %1279 = vst [vmem:[%s8] sm:$0xff] %v1275
  %1280 = vst [vmem:[%s8 + $0x8] sm:$0xff] %v1276
  %1281 = vst [vmem:[%s8 + $0x10] sm:$0xff] %v1277
  %1282 = vst [vmem:[%s8 + $0x18] sm:$0xff] %v1278
  // Predicated region
  $region34: #{double_conv.1} parent=0 // pred_check
    _
  $region35: #{double_conv.1} parent=0 // pred_check_branch
    %1284 = sbr.rel (0) target = $region37
  $region36: #{double_conv.1} parent=0 // pred_region
    _
  $region37: #{double_conv.1} parent=0 // pred_fallthru
    _
  // Predicated region
  $region38: #{double_conv.1} parent=0 // pred_check
    _
  $region39: #{double_conv.1} parent=0 // pred_check_branch
    %1286 = sbr.rel (0) target = $region41
  $region40: #{double_conv.1} parent=0 // pred_region
    _
  $region41: #{double_conv.1} parent=0 // pred_fallthru
    _

</llo_original>
